<compile_context>
chip_gen: v7x
topology: tpu7x:2x2x1
jax: 0.10.0
libtpu: 0.0.40
codegen_flags: <defaults>
</compile_context>

<pallas_src>
import math
import functools

import jax
import jax.numpy as jnp
from jax.experimental import pallas as pl
from jax.experimental.pallas import tpu as pltpu


def _layernorm(v, gamma, beta, eps=1e-5):
    mu = jnp.mean(v, axis=-1, keepdims=True)
    var = jnp.mean((v - mu) ** 2, axis=-1, keepdims=True)
    return (v - mu) * jax.lax.rsqrt(var + eps) * gamma + beta


def _encoder_layer_kernel(nhead, B_blk, L, f_chunks,
                          x_ref,                    # (B_blk*L, E)
                          wqkv_ref, bqkv_ref,       # (E, 3E), (1, 3E)   pre-transposed
                          wo_ref, bo_ref,           # (E, E),  (1, E)    pre-transposed
                          w1_ref, b1_ref,           # (E, F),  (1, F)    pre-transposed
                          w2_ref, b2_ref,           # (F, E),  (1, E)    pre-transposed
                          g1_ref, be1_ref,          # (1, E), (1, E)
                          g2_ref, be2_ref,          # (1, E), (1, E)
                          o_ref):                   # (B_blk*L, E)
    E = wo_ref.shape[0]
    hd = E // nhead
    scale = 1.0 / math.sqrt(hd)
    M = B_blk * L

    x = x_ref[...].astype(jnp.float32)              # (M, E)

    # ---- pre-norm 1 + fused QKV projection (one big MXU matmul) ----
    xn = _layernorm(x, g1_ref[...], be1_ref[...])
    qkv = jnp.dot(xn, wqkv_ref[...], preferred_element_type=jnp.float32) + bqkv_ref[...]
    q = qkv[:, 0:E] * scale
    k = qkv[:, E:2 * E]
    v = qkv[:, 2 * E:3 * E]

    # ---- head-batched self-attention: all (sequence, head) pairs in ONE batch ----
    def to_heads(t):                                # (M, E) -> (nhead*B_blk, L, hd)
        return jnp.concatenate(
            [t[:, h * hd:(h + 1) * hd].reshape(B_blk, L, hd) for h in range(nhead)],
            axis=0)

    qh, kh, vh = to_heads(q), to_heads(k), to_heads(v)

    s = jnp.einsum("bld,bmd->blm", qh, kh, preferred_element_type=jnp.float32)
    s = s - jnp.max(s, axis=-1, keepdims=True)
    p = jnp.exp(s)
    denom = jnp.sum(p, axis=-1, keepdims=True)
    r = pl.reciprocal(denom, approx=True)           # EUP vrcp (free slot)
    r = r * (2.0 - denom * r)                       # 1 Newton step -> ~f32 accuracy
    p = p * r
    ctx_h = jnp.einsum("blm,bmd->bld", p, vh, preferred_element_type=jnp.float32)

    # reassemble heads into the lane dimension for a single output projection
    ctx = jnp.concatenate(
        [ctx_h[h * B_blk:(h + 1) * B_blk].reshape(M, hd) for h in range(nhead)],
        axis=-1)                                    # (M, E)

    attn = jnp.dot(ctx, wo_ref[...], preferred_element_type=jnp.float32) + bo_ref[...]
    x = x + attn                                    # residual (dropout1 = identity)

    # ---- pre-norm 2 + feed-forward, hidden dim tiled in bounded chunks ----
    xn2 = _layernorm(x, g2_ref[...], be2_ref[...])
    ff = jnp.zeros((M, E), jnp.float32)
    for c0, cs in f_chunks:                         # static Python loop; 1 iter at toy F
        h1 = jnp.dot(xn2, w1_ref[:, c0:c0 + cs],
                     preferred_element_type=jnp.float32) + b1_ref[:, c0:c0 + cs]
        h1 = jnp.maximum(h1, 0.0)                   # ReLU (dropout = identity)
        ff = ff + jnp.dot(h1, w2_ref[c0:c0 + cs, :],
                          preferred_element_type=jnp.float32)
    ff = ff + b2_ref[...]

    o_ref[...] = (x + ff).astype(o_ref.dtype)       # residual (dropout2 = identity)


def transformer_encoder_layer(x_lne, params, nhead):
    """x_lne: (L, N, E)  -- PyTorch MultiheadAttention layout."""
    L, N, E = x_lne.shape
    F = params["w1"].shape[0]

    # (L, N, E) -> (N, L, E) -> (N*L, E): each grid block is a contiguous
    # (B_blk*L, E) slab (large MXU M dimension).
    # TODO(synk): when stacking layers keep activations in (N*L, E) layout to
    #             avoid this HBM round-trip transpose at every layer.
    x2d = jnp.transpose(x_lne, (1, 0, 2)).reshape(N * L, E)

    # ---- generation-aware VMEM budget (v7x: 64 MiB/TC; v5e/v6e: 128 MiB) ----
    try:
        vmem_cap = int(pltpu.get_tpu_info().vmem_capacity_bytes)
    except Exception:
        vmem_cap = 64 * 2 ** 20                     # conservative (v7x) fallback
    vmem_limit = max(32 * 2 ** 20, int(0.70 * vmem_cap))

    # FFN hidden-dim chunking keeps the (rows, chunk) intermediate bounded.
    f_chunk = min(F, 1024)
    f_chunks = tuple((c, min(f_chunk, F - c)) for c in range(0, F, f_chunk))

    # Row budget from the VMEM budget: double-buffered resident weights +
    # per-row f32 working set (x, xn, qkv, ctx, attn, ff, h1 chunk, scores) +
    # double-buffered in/out slabs.
    weight_bytes = 4 * (3 * E * E + 3 * E + E * E + E + E * F + F + F * E + E + 4 * E)
    per_row_bytes = 4 * (8 * E + f_chunk + nhead * L) + 4 * 4 * E
    row_budget = (vmem_limit - 2 * weight_bytes) // max(per_row_bytes, 1)
    row_budget = int(max(L, min(row_budget, 1024)))

    # B_blk: divisor of N with sublane-aligned rows and within the row budget;
    # prefer >= 2 grid steps so the parallel axis shards across both v7x TCs.
    candidates = [d for d in range(1, N + 1)
                  if N % d == 0 and ((d * L) % 8 == 0 or d == N)]
    under = [d for d in candidates if d * L <= row_budget] or [min(candidates)]
    multi = [d for d in under if N // d >= 2]
    B_blk = max(multi) if multi else max(under)
    grid = (N // B_blk,)
    blk_rows = B_blk * L

    # Pre-transposed (contraction-major) weights; 2-D views of 1-D params.
    weights = [
        params["in_proj_w"].T,                  params["in_proj_b"].reshape(1, 3 * E),
        params["out_proj_w"].T,                 params["out_proj_b"].reshape(1, E),
        params["w1"].T,                         params["b1"].reshape(1, F),
        params["w2"].T,                         params["b2"].reshape(1, E),
        params["g1"].reshape(1, E),             params["be1"].reshape(1, E),
        params["g2"].reshape(1, E),             params["be2"].reshape(1, E),
    ]

    def full_spec(arr):
        zeros = (0,) * arr.ndim
        return pl.BlockSpec(arr.shape, lambda b, _z=zeros: _z)

    in_specs = [pl.BlockSpec((blk_rows, E), lambda b: (b, 0))] + [full_spec(w) for w in weights]
    out_spec = pl.BlockSpec((blk_rows, E), lambda b: (b, 0))

    # Advisory cost estimate.
    M = N * L
    hd = E // nhead
    flops = (2 * M * E * (3 * E)            # fused QKV
             + 4 * N * nhead * L * L * hd   # scores + values
             + 2 * M * E * E                # output projection
             + 4 * M * E * F)               # FFN (both matmuls)
    transcendentals = N * nhead * L * L + 2 * M
    weight_bytes_f32 = sum(int(w.size) * w.dtype.itemsize for w in weights)
    io_bytes = 2 * M * E * x_lne.dtype.itemsize

    out2d = pl.pallas_call(
        functools.partial(_encoder_layer_kernel, nhead, B_blk, L, f_chunks),
        out_shape=jax.ShapeDtypeStruct((N * L, E), x_lne.dtype),
        grid_spec=pltpu.PrefetchScalarGridSpec(
            num_scalar_prefetch=0,
            grid=grid,
            in_specs=in_specs,
            out_specs=out_spec,
        ),
        compiler_params=pltpu.CompilerParams(
            dimension_semantics=("parallel",),
            vmem_limit_bytes=int(vmem_limit),
        ),
        cost_estimate=pl.CostEstimate(
            flops=int(flops),
            transcendentals=int(transcendentals),
            bytes_accessed=int(weight_bytes_f32 + io_bytes),
        ),
    )(x2d, *weights)

    return jnp.transpose(out2d.reshape(N, L, E), (1, 0, 2))   # back to (L, N, E)


# ---------------- pure-JAX reference (mirrors PyTorch semantics, eval mode) ----------------
def reference(x_lne, params, nhead):
    L, N, E = x_lne.shape
    hd = E // nhead

    def ln(v, g, b):
        mu = jnp.mean(v, axis=-1, keepdims=True)
        var = jnp.mean((v - mu) ** 2, axis=-1, keepdims=True)
        return (v - mu) / jnp.sqrt(var + 1e-5) * g + b

    x = x_lne
    x2 = ln(x, params["g1"], params["be1"])
    w, b = params["in_proj_w"], params["in_proj_b"]
    q = x2 @ w[:E].T + b[:E]
    k = x2 @ w[E:2 * E].T + b[E:2 * E]
    v = x2 @ w[2 * E:].T + b[2 * E:]

    def split(t):   # (L, N, E) -> (N*nhead, L, hd)
        return jnp.transpose(t.reshape(L, N * nhead, hd), (1, 0, 2))

    qh, kh, vh = split(q) / math.sqrt(hd), split(k), split(v)
    s = jnp.einsum("bld,bmd->blm", qh, kh)
    p = jax.nn.softmax(s, axis=-1)
    oh = jnp.einsum("blm,bmd->bld", p, vh)            # (N*nhead, L, hd)
    oh = jnp.transpose(oh, (1, 0, 2)).reshape(L, N, E)
    attn = oh @ params["out_proj_w"].T + params["out_proj_b"]
    x = x + attn
    x2 = ln(x, params["g2"], params["be2"])
    ff = jnp.maximum(x2 @ params["w1"].T + params["b1"], 0.0) @ params["w2"].T + params["b2"]
    return x + ff


if __name__ == "__main__":
    L, N, E, nhead, F = 8, 2, 32, 4, 64   # seq, batch, d_model, heads, dim_feedforward

    key = jax.random.PRNGKey(0)
    ks = jax.random.split(key, 9)
    params = {
        "in_proj_w":  0.05 * jax.random.normal(ks[0], (3 * E, E), jnp.float32),
        "in_proj_b":  0.01 * jax.random.normal(ks[1], (3 * E,), jnp.float32),
        "out_proj_w": 0.05 * jax.random.normal(ks[2], (E, E), jnp.float32),
        "out_proj_b": 0.01 * jax.random.normal(ks[3], (E,), jnp.float32),
        "w1":         0.05 * jax.random.normal(ks[4], (F, E), jnp.float32),
        "b1":         0.01 * jax.random.normal(ks[5], (F,), jnp.float32),
        "w2":         0.05 * jax.random.normal(ks[6], (E, F), jnp.float32),
        "b2":         0.01 * jax.random.normal(ks[7], (E,), jnp.float32),
        "g1": jnp.ones((E,), jnp.float32), "be1": jnp.zeros((E,), jnp.float32),
        "g2": jnp.ones((E,), jnp.float32), "be2": jnp.zeros((E,), jnp.float32),
    }

    x = jax.random.normal(ks[8], (L, N, E), jnp.float32)

    out = transformer_encoder_layer(x, params, nhead)
    out = jax.block_until_ready(out)

    ref = reference(x, params, nhead)
    assert out.shape == (L, N, E)
    assert jnp.all(jnp.isfinite(out))
    assert jnp.allclose(out, ref, atol=1e-4, rtol=1e-4), float(jnp.max(jnp.abs(out - ref)))
    print("KERNEL_OK")
</pallas_src>

<mosaic_0001>
module attributes {stable_mosaic.version = 11 : i64} {
  func.func @_encoder_layer_kernel(%arg0: i32, %arg1: memref<8x32xf32, #tpu.memory_space<vmem>>, %arg2: memref<32x96xf32, #tpu.memory_space<vmem>>, %arg3: memref<1x96xf32, #tpu.memory_space<vmem>>, %arg4: memref<32x32xf32, #tpu.memory_space<vmem>>, %arg5: memref<1x32xf32, #tpu.memory_space<vmem>>, %arg6: memref<32x64xf32, #tpu.memory_space<vmem>>, %arg7: memref<1x64xf32, #tpu.memory_space<vmem>>, %arg8: memref<64x32xf32, #tpu.memory_space<vmem>>, %arg9: memref<1x32xf32, #tpu.memory_space<vmem>>, %arg10: memref<1x32xf32, #tpu.memory_space<vmem>>, %arg11: memref<1x32xf32, #tpu.memory_space<vmem>>, %arg12: memref<1x32xf32, #tpu.memory_space<vmem>>, %arg13: memref<1x32xf32, #tpu.memory_space<vmem>>, %arg14: memref<8x32xf32, #tpu.memory_space<vmem>>) attributes {dimension_semantics = [#tpu.dimension_semantics<parallel>], iteration_bounds = array<i64: 2>, scalar_prefetch = 0 : i64, scratch_operands = 0 : i64, tpu.core_type = #tpu.core_type<tc>, window_params = [{transform_indices = @transform_0, window_bounds = array<i64: 8, 32>}, {pipeline_mode = #tpu.pipeline_mode<synchronous>, transform_indices = @transform_1, window_bounds = array<i64: 32, 96>}, {pipeline_mode = #tpu.pipeline_mode<synchronous>, transform_indices = @transform_2, window_bounds = array<i64: 1, 96>}, {pipeline_mode = #tpu.pipeline_mode<synchronous>, transform_indices = @transform_3, window_bounds = array<i64: 32, 32>}, {pipeline_mode = #tpu.pipeline_mode<synchronous>, transform_indices = @transform_4, window_bounds = array<i64: 1, 32>}, {pipeline_mode = #tpu.pipeline_mode<synchronous>, transform_indices = @transform_5, window_bounds = array<i64: 32, 64>}, {pipeline_mode = #tpu.pipeline_mode<synchronous>, transform_indices = @transform_6, window_bounds = array<i64: 1, 64>}, {pipeline_mode = #tpu.pipeline_mode<synchronous>, transform_indices = @transform_7, window_bounds = array<i64: 64, 32>}, {pipeline_mode = #tpu.pipeline_mode<synchronous>, transform_indices = @transform_8, window_bounds = array<i64: 1, 32>}, {pipeline_mode = #tpu.pipeline_mode<synchronous>, transform_indices = @transform_9, window_bounds = array<i64: 1, 32>}, {pipeline_mode = #tpu.pipeline_mode<synchronous>, transform_indices = @transform_10, window_bounds = array<i64: 1, 32>}, {pipeline_mode = #tpu.pipeline_mode<synchronous>, transform_indices = @transform_11, window_bounds = array<i64: 1, 32>}, {pipeline_mode = #tpu.pipeline_mode<synchronous>, transform_indices = @transform_12, window_bounds = array<i64: 1, 32>}, {transform_indices = @transform_13, window_bounds = array<i64: 8, 32>}]} {
    %c0 = arith.constant 0 : index
    %c0_0 = arith.constant 0 : index
    %0 = vector.load %arg1[%c0, %c0_0] : memref<8x32xf32, #tpu.memory_space<vmem>>, vector<8x32xf32>
    %c0_1 = arith.constant 0 : index
    %c0_2 = arith.constant 0 : index
    %1 = vector.load %arg10[%c0_1, %c0_2] : memref<1x32xf32, #tpu.memory_space<vmem>>, vector<1x32xf32>
    %c0_3 = arith.constant 0 : index
    %c0_4 = arith.constant 0 : index
    %2 = vector.load %arg11[%c0_3, %c0_4] : memref<1x32xf32, #tpu.memory_space<vmem>>, vector<1x32xf32>
    %cst = arith.constant dense<0.000000e+00> : vector<8xf32>
    %3 = vector.multi_reduction <add>, %0, %cst [1] : vector<8x32xf32> to vector<8xf32>
    %4 = vector.shape_cast %3 : vector<8xf32> to vector<8x1xf32>
    %cst_5 = arith.constant 3.200000e+01 : f32
    %5 = vector.broadcast %cst_5 : f32 to vector<8x1xf32>
    %6 = arith.divf %4, %5 : vector<8x1xf32>
    %7 = vector.broadcast %6 : vector<8x1xf32> to vector<8x32xf32>
    %8 = arith.subf %0, %7 : vector<8x32xf32>
    %9 = arith.mulf %8, %8 : vector<8x32xf32>
    %cst_6 = arith.constant dense<0.000000e+00> : vector<8xf32>
    %10 = vector.multi_reduction <add>, %9, %cst_6 [1] : vector<8x32xf32> to vector<8xf32>
    %11 = vector.shape_cast %10 : vector<8xf32> to vector<8x1xf32>
    %cst_7 = arith.constant 3.200000e+01 : f32
    %12 = vector.broadcast %cst_7 : f32 to vector<8x1xf32>
    %13 = arith.divf %11, %12 : vector<8x1xf32>
    %14 = vector.broadcast %6 : vector<8x1xf32> to vector<8x32xf32>
    %15 = arith.subf %0, %14 : vector<8x32xf32>
    %cst_8 = arith.constant 9.99999974E-6 : f32
    %16 = vector.broadcast %cst_8 : f32 to vector<8x1xf32>
    %17 = arith.addf %13, %16 : vector<8x1xf32>
    %18 = math.rsqrt %17 : vector<8x1xf32>
    %19 = vector.broadcast %18 : vector<8x1xf32> to vector<8x32xf32>
    %20 = arith.mulf %15, %19 : vector<8x32xf32>
    %21 = vector.broadcast %1 : vector<1x32xf32> to vector<8x32xf32>
    %22 = arith.mulf %20, %21 : vector<8x32xf32>
    %23 = vector.broadcast %2 : vector<1x32xf32> to vector<8x32xf32>
    %24 = arith.addf %22, %23 : vector<8x32xf32>
    %c0_9 = arith.constant 0 : index
    %c0_10 = arith.constant 0 : index
    %25 = vector.load %arg2[%c0_9, %c0_10] : memref<32x96xf32, #tpu.memory_space<vmem>>, vector<32x96xf32>
    %cst_11 = arith.constant dense<0.000000e+00> : vector<8x96xf32>
    %26 = tpu.matmul %24, %25, %cst_11 {dimension_numbers = #tpu.dot_dimension_numbers<[1], [0], [0], [1], [0, 0, 1, 1], [], []>} : vector<8x32xf32>, vector<32x96xf32>, vector<8x96xf32> -> vector<8x96xf32>
    %c0_12 = arith.constant 0 : index
    %c0_13 = arith.constant 0 : index
    %27 = vector.load %arg3[%c0_12, %c0_13] : memref<1x96xf32, #tpu.memory_space<vmem>>, vector<1x96xf32>
    %28 = vector.broadcast %27 : vector<1x96xf32> to vector<8x96xf32>
    %29 = arith.addf %26, %28 : vector<8x96xf32>
    %30 = vector.extract_strided_slice %29 {offsets = [0, 0], sizes = [8, 32], strides = [1, 1]} : vector<8x96xf32> to vector<8x32xf32>
    %cst_14 = arith.constant 0.353553385 : f32
    %31 = vector.broadcast %cst_14 : f32 to vector<8x32xf32>
    %32 = arith.mulf %30, %31 : vector<8x32xf32>
    %33 = vector.extract_strided_slice %29 {offsets = [0, 32], sizes = [8, 32], strides = [1, 1]} : vector<8x96xf32> to vector<8x32xf32>
    %34 = vector.extract_strided_slice %29 {offsets = [0, 64], sizes = [8, 32], strides = [1, 1]} : vector<8x96xf32> to vector<8x32xf32>
    %35 = vector.extract_strided_slice %32 {offsets = [0, 0], sizes = [8, 8], strides = [1, 1]} : vector<8x32xf32> to vector<8x8xf32>
    %36 = vector.shape_cast %35 : vector<8x8xf32> to vector<1x8x8xf32>
    %37 = vector.extract_strided_slice %32 {offsets = [0, 8], sizes = [8, 8], strides = [1, 1]} : vector<8x32xf32> to vector<8x8xf32>
    %38 = vector.shape_cast %37 : vector<8x8xf32> to vector<1x8x8xf32>
    %39 = vector.extract_strided_slice %32 {offsets = [0, 16], sizes = [8, 8], strides = [1, 1]} : vector<8x32xf32> to vector<8x8xf32>
    %40 = vector.shape_cast %39 : vector<8x8xf32> to vector<1x8x8xf32>
    %41 = vector.extract_strided_slice %32 {offsets = [0, 24], sizes = [8, 8], strides = [1, 1]} : vector<8x32xf32> to vector<8x8xf32>
    %42 = vector.shape_cast %41 : vector<8x8xf32> to vector<1x8x8xf32>
    %43 = tpu.concatenate %36, %38, %40, %42 in 0 : vector<1x8x8xf32>, vector<1x8x8xf32>, vector<1x8x8xf32>, vector<1x8x8xf32> -> vector<4x8x8xf32>
    %44 = vector.extract_strided_slice %33 {offsets = [0, 0], sizes = [8, 8], strides = [1, 1]} : vector<8x32xf32> to vector<8x8xf32>
    %45 = vector.shape_cast %44 : vector<8x8xf32> to vector<1x8x8xf32>
    %46 = vector.extract_strided_slice %33 {offsets = [0, 8], sizes = [8, 8], strides = [1, 1]} : vector<8x32xf32> to vector<8x8xf32>
    %47 = vector.shape_cast %46 : vector<8x8xf32> to vector<1x8x8xf32>
    %48 = vector.extract_strided_slice %33 {offsets = [0, 16], sizes = [8, 8], strides = [1, 1]} : vector<8x32xf32> to vector<8x8xf32>
    %49 = vector.shape_cast %48 : vector<8x8xf32> to vector<1x8x8xf32>
    %50 = vector.extract_strided_slice %33 {offsets = [0, 24], sizes = [8, 8], strides = [1, 1]} : vector<8x32xf32> to vector<8x8xf32>
    %51 = vector.shape_cast %50 : vector<8x8xf32> to vector<1x8x8xf32>
    %52 = tpu.concatenate %45, %47, %49, %51 in 0 : vector<1x8x8xf32>, vector<1x8x8xf32>, vector<1x8x8xf32>, vector<1x8x8xf32> -> vector<4x8x8xf32>
    %53 = vector.extract_strided_slice %34 {offsets = [0, 0], sizes = [8, 8], strides = [1, 1]} : vector<8x32xf32> to vector<8x8xf32>
    %54 = vector.shape_cast %53 : vector<8x8xf32> to vector<1x8x8xf32>
    %55 = vector.extract_strided_slice %34 {offsets = [0, 8], sizes = [8, 8], strides = [1, 1]} : vector<8x32xf32> to vector<8x8xf32>
    %56 = vector.shape_cast %55 : vector<8x8xf32> to vector<1x8x8xf32>
    %57 = vector.extract_strided_slice %34 {offsets = [0, 16], sizes = [8, 8], strides = [1, 1]} : vector<8x32xf32> to vector<8x8xf32>
    %58 = vector.shape_cast %57 : vector<8x8xf32> to vector<1x8x8xf32>
    %59 = vector.extract_strided_slice %34 {offsets = [0, 24], sizes = [8, 8], strides = [1, 1]} : vector<8x32xf32> to vector<8x8xf32>
    %60 = vector.shape_cast %59 : vector<8x8xf32> to vector<1x8x8xf32>
    %61 = tpu.concatenate %54, %56, %58, %60 in 0 : vector<1x8x8xf32>, vector<1x8x8xf32>, vector<1x8x8xf32>, vector<1x8x8xf32> -> vector<4x8x8xf32>
    "tpu.trace_start"() <{level = 10 : i32, message = "bld,bmd->blm"}> : () -> ()
    %cst_15 = arith.constant dense<0.000000e+00> : vector<4x8x8xf32>
    %62 = tpu.matmul %43, %52, %cst_15 {dimension_numbers = #tpu.dot_dimension_numbers<[2], [2], [1], [1], [0, 0, 0, 1, 1, 1], [0], [0]>} : vector<4x8x8xf32>, vector<4x8x8xf32>, vector<4x8x8xf32> -> vector<4x8x8xf32>
    "tpu.trace_stop"() : () -> ()
    %cst_16 = arith.constant dense<0xFF800000> : vector<4x8xf32>
    %63 = vector.multi_reduction <maximumf>, %62, %cst_16 [2] : vector<4x8x8xf32> to vector<4x8xf32>
    %64 = vector.shape_cast %63 : vector<4x8xf32> to vector<4x8x1xf32>
    %65 = vector.broadcast %64 : vector<4x8x1xf32> to vector<4x8x8xf32>
    %66 = arith.subf %62, %65 : vector<4x8x8xf32>
    %67 = math.exp %66 : vector<4x8x8xf32>
    %cst_17 = arith.constant dense<0.000000e+00> : vector<4x8xf32>
    %68 = vector.multi_reduction <add>, %67, %cst_17 [2] : vector<4x8x8xf32> to vector<4x8xf32>
    %69 = vector.shape_cast %68 : vector<4x8xf32> to vector<4x8x1xf32>
    %70 = tpu.reciprocal %69 {approx = true} : vector<4x8x1xf32> -> vector<4x8x1xf32>
    %71 = arith.mulf %69, %70 : vector<4x8x1xf32>
    %cst_18 = arith.constant 2.000000e+00 : f32
    %72 = vector.broadcast %cst_18 : f32 to vector<4x8x1xf32>
    %73 = arith.subf %72, %71 : vector<4x8x1xf32>
    %74 = arith.mulf %70, %73 : vector<4x8x1xf32>
    %75 = vector.broadcast %74 : vector<4x8x1xf32> to vector<4x8x8xf32>
    %76 = arith.mulf %67, %75 : vector<4x8x8xf32>
    "tpu.trace_start"() <{level = 10 : i32, message = "blm,bmd->bld"}> : () -> ()
    %cst_19 = arith.constant dense<0.000000e+00> : vector<4x8x8xf32>
    %77 = tpu.matmul %76, %61, %cst_19 {dimension_numbers = #tpu.dot_dimension_numbers<[2], [1], [1], [2], [0, 0, 0, 1, 1, 2], [0], [0]>} : vector<4x8x8xf32>, vector<4x8x8xf32>, vector<4x8x8xf32> -> vector<4x8x8xf32>
    "tpu.trace_stop"() : () -> ()
    %78 = vector.extract_strided_slice %77 {offsets = [0, 0, 0], sizes = [1, 8, 8], strides = [1, 1, 1]} : vector<4x8x8xf32> to vector<1x8x8xf32>
    %79 = vector.shape_cast %78 : vector<1x8x8xf32> to vector<8x8xf32>
    %80 = vector.extract_strided_slice %77 {offsets = [1, 0, 0], sizes = [1, 8, 8], strides = [1, 1, 1]} : vector<4x8x8xf32> to vector<1x8x8xf32>
    %81 = vector.shape_cast %80 : vector<1x8x8xf32> to vector<8x8xf32>
    %82 = vector.extract_strided_slice %77 {offsets = [2, 0, 0], sizes = [1, 8, 8], strides = [1, 1, 1]} : vector<4x8x8xf32> to vector<1x8x8xf32>
    %83 = vector.shape_cast %82 : vector<1x8x8xf32> to vector<8x8xf32>
    %84 = vector.extract_strided_slice %77 {offsets = [3, 0, 0], sizes = [1, 8, 8], strides = [1, 1, 1]} : vector<4x8x8xf32> to vector<1x8x8xf32>
    %85 = vector.shape_cast %84 : vector<1x8x8xf32> to vector<8x8xf32>
    %86 = tpu.concatenate %79, %81, %83, %85 in 1 : vector<8x8xf32>, vector<8x8xf32>, vector<8x8xf32>, vector<8x8xf32> -> vector<8x32xf32>
    %c0_20 = arith.constant 0 : index
    %c0_21 = arith.constant 0 : index
    %87 = vector.load %arg4[%c0_20, %c0_21] : memref<32x32xf32, #tpu.memory_space<vmem>>, vector<32x32xf32>
    %cst_22 = arith.constant dense<0.000000e+00> : vector<8x32xf32>
    %88 = tpu.matmul %86, %87, %cst_22 {dimension_numbers = #tpu.dot_dimension_numbers<[1], [0], [0], [1], [0, 0, 1, 1], [], []>} : vector<8x32xf32>, vector<32x32xf32>, vector<8x32xf32> -> vector<8x32xf32>
    %c0_23 = arith.constant 0 : index
    %c0_24 = arith.constant 0 : index
    %89 = vector.load %arg5[%c0_23, %c0_24] : memref<1x32xf32, #tpu.memory_space<vmem>>, vector<1x32xf32>
    %90 = vector.broadcast %89 : vector<1x32xf32> to vector<8x32xf32>
    %91 = arith.addf %88, %90 : vector<8x32xf32>
    %92 = arith.addf %0, %91 : vector<8x32xf32>
    %c0_25 = arith.constant 0 : index
    %c0_26 = arith.constant 0 : index
    %93 = vector.load %arg12[%c0_25, %c0_26] : memref<1x32xf32, #tpu.memory_space<vmem>>, vector<1x32xf32>
    %c0_27 = arith.constant 0 : index
    %c0_28 = arith.constant 0 : index
    %94 = vector.load %arg13[%c0_27, %c0_28] : memref<1x32xf32, #tpu.memory_space<vmem>>, vector<1x32xf32>
    %cst_29 = arith.constant dense<0.000000e+00> : vector<8xf32>
    %95 = vector.multi_reduction <add>, %92, %cst_29 [1] : vector<8x32xf32> to vector<8xf32>
    %96 = vector.shape_cast %95 : vector<8xf32> to vector<8x1xf32>
    %cst_30 = arith.constant 3.200000e+01 : f32
    %97 = vector.broadcast %cst_30 : f32 to vector<8x1xf32>
    %98 = arith.divf %96, %97 : vector<8x1xf32>
    %99 = vector.broadcast %98 : vector<8x1xf32> to vector<8x32xf32>
    %100 = arith.subf %92, %99 : vector<8x32xf32>
    %101 = arith.mulf %100, %100 : vector<8x32xf32>
    %cst_31 = arith.constant dense<0.000000e+00> : vector<8xf32>
    %102 = vector.multi_reduction <add>, %101, %cst_31 [1] : vector<8x32xf32> to vector<8xf32>
    %103 = vector.shape_cast %102 : vector<8xf32> to vector<8x1xf32>
    %cst_32 = arith.constant 3.200000e+01 : f32
    %104 = vector.broadcast %cst_32 : f32 to vector<8x1xf32>
    %105 = arith.divf %103, %104 : vector<8x1xf32>
    %106 = vector.broadcast %98 : vector<8x1xf32> to vector<8x32xf32>
    %107 = arith.subf %92, %106 : vector<8x32xf32>
    %cst_33 = arith.constant 9.99999974E-6 : f32
    %108 = vector.broadcast %cst_33 : f32 to vector<8x1xf32>
    %109 = arith.addf %105, %108 : vector<8x1xf32>
    %110 = math.rsqrt %109 : vector<8x1xf32>
    %111 = vector.broadcast %110 : vector<8x1xf32> to vector<8x32xf32>
    %112 = arith.mulf %107, %111 : vector<8x32xf32>
    %113 = vector.broadcast %93 : vector<1x32xf32> to vector<8x32xf32>
    %114 = arith.mulf %112, %113 : vector<8x32xf32>
    %115 = vector.broadcast %94 : vector<1x32xf32> to vector<8x32xf32>
    %116 = arith.addf %114, %115 : vector<8x32xf32>
    %cst_34 = arith.constant 0.000000e+00 : f32
    %117 = vector.broadcast %cst_34 : f32 to vector<8x32xf32>
    %c0_35 = arith.constant 0 : index
    %c0_36 = arith.constant 0 : index
    %118 = vector.load %arg6[%c0_35, %c0_36] : memref<32x64xf32, #tpu.memory_space<vmem>>, vector<32x64xf32>
    %cst_37 = arith.constant dense<0.000000e+00> : vector<8x64xf32>
    %119 = tpu.matmul %116, %118, %cst_37 {dimension_numbers = #tpu.dot_dimension_numbers<[1], [0], [0], [1], [0, 0, 1, 1], [], []>} : vector<8x32xf32>, vector<32x64xf32>, vector<8x64xf32> -> vector<8x64xf32>
    %c0_38 = arith.constant 0 : index
    %c0_39 = arith.constant 0 : index
    %120 = vector.load %arg7[%c0_38, %c0_39] : memref<1x64xf32, #tpu.memory_space<vmem>>, vector<1x64xf32>
    %121 = vector.broadcast %120 : vector<1x64xf32> to vector<8x64xf32>
    %122 = arith.addf %119, %121 : vector<8x64xf32>
    %cst_40 = arith.constant 0.000000e+00 : f32
    %123 = vector.broadcast %cst_40 : f32 to vector<8x64xf32>
    %124 = arith.maximumf %122, %123 : vector<8x64xf32>
    %c0_41 = arith.constant 0 : index
    %c0_42 = arith.constant 0 : index
    %125 = vector.load %arg8[%c0_41, %c0_42] : memref<64x32xf32, #tpu.memory_space<vmem>>, vector<64x32xf32>
    %cst_43 = arith.constant dense<0.000000e+00> : vector<8x32xf32>
    %126 = tpu.matmul %124, %125, %cst_43 {dimension_numbers = #tpu.dot_dimension_numbers<[1], [0], [0], [1], [0, 0, 1, 1], [], []>} : vector<8x64xf32>, vector<64x32xf32>, vector<8x32xf32> -> vector<8x32xf32>
    %127 = arith.addf %117, %126 : vector<8x32xf32>
    %c0_44 = arith.constant 0 : index
    %c0_45 = arith.constant 0 : index
    %128 = vector.load %arg9[%c0_44, %c0_45] : memref<1x32xf32, #tpu.memory_space<vmem>>, vector<1x32xf32>
    %129 = vector.broadcast %128 : vector<1x32xf32> to vector<8x32xf32>
    %130 = arith.addf %127, %129 : vector<8x32xf32>
    %131 = arith.addf %92, %130 : vector<8x32xf32>
    %c0_46 = arith.constant 0 : index
    %c0_47 = arith.constant 0 : index
    %132 = vector.load %arg14[%c0_46, %c0_47] : memref<8x32xf32, #tpu.memory_space<vmem>>, vector<8x32xf32>
    tpu.vector_store %arg14[%c0_46, %c0_47], %131 {strides = array<i32>} : memref<8x32xf32, #tpu.memory_space<vmem>>, vector<8x32xf32>,
    return
  }
  func.func @transform_0(%arg0: i32) -> (i32, i32) {
    %c0_i32 = arith.constant 0 : i32
    %c0_i32_0 = arith.constant 0 : i32
    return %arg0, %c0_i32 : i32, i32
  }
  func.func @transform_1(%arg0: i32) -> (i32, i32) {
    %c0_i32 = arith.constant 0 : i32
    %c0_i32_0 = arith.constant 0 : i32
    %c0_i32_1 = arith.constant 0 : i32
    return %c0_i32, %c0_i32_0 : i32, i32
  }
  func.func @transform_2(%arg0: i32) -> (i32, i32) {
    %c0_i32 = arith.constant 0 : i32
    %c0_i32_0 = arith.constant 0 : i32
    %c0_i32_1 = arith.constant 0 : i32
    return %c0_i32, %c0_i32_0 : i32, i32
  }
  func.func @transform_3(%arg0: i32) -> (i32, i32) {
    %c0_i32 = arith.constant 0 : i32
    %c0_i32_0 = arith.constant 0 : i32
    %c0_i32_1 = arith.constant 0 : i32
    return %c0_i32, %c0_i32_0 : i32, i32
  }
  func.func @transform_4(%arg0: i32) -> (i32, i32) {
    %c0_i32 = arith.constant 0 : i32
    %c0_i32_0 = arith.constant 0 : i32
    %c0_i32_1 = arith.constant 0 : i32
    return %c0_i32, %c0_i32_0 : i32, i32
  }
  func.func @transform_5(%arg0: i32) -> (i32, i32) {
    %c0_i32 = arith.constant 0 : i32
    %c0_i32_0 = arith.constant 0 : i32
    %c0_i32_1 = arith.constant 0 : i32
    return %c0_i32, %c0_i32_0 : i32, i32
  }
  func.func @transform_6(%arg0: i32) -> (i32, i32) {
    %c0_i32 = arith.constant 0 : i32
    %c0_i32_0 = arith.constant 0 : i32
    %c0_i32_1 = arith.constant 0 : i32
    return %c0_i32, %c0_i32_0 : i32, i32
  }
  func.func @transform_7(%arg0: i32) -> (i32, i32) {
    %c0_i32 = arith.constant 0 : i32
    %c0_i32_0 = arith.constant 0 : i32
    %c0_i32_1 = arith.constant 0 : i32
    return %c0_i32, %c0_i32_0 : i32, i32
  }
  func.func @transform_8(%arg0: i32) -> (i32, i32) {
    %c0_i32 = arith.constant 0 : i32
    %c0_i32_0 = arith.constant 0 : i32
    %c0_i32_1 = arith.constant 0 : i32
    return %c0_i32, %c0_i32_0 : i32, i32
  }
  func.func @transform_9(%arg0: i32) -> (i32, i32) {
    %c0_i32 = arith.constant 0 : i32
    %c0_i32_0 = arith.constant 0 : i32
    %c0_i32_1 = arith.constant 0 : i32
    return %c0_i32, %c0_i32_0 : i32, i32
  }
  func.func @transform_10(%arg0: i32) -> (i32, i32) {
    %c0_i32 = arith.constant 0 : i32
    %c0_i32_0 = arith.constant 0 : i32
    %c0_i32_1 = arith.constant 0 : i32
    return %c0_i32, %c0_i32_0 : i32, i32
  }
  func.func @transform_11(%arg0: i32) -> (i32, i32) {
    %c0_i32 = arith.constant 0 : i32
    %c0_i32_0 = arith.constant 0 : i32
    %c0_i32_1 = arith.constant 0 : i32
    return %c0_i32, %c0_i32_0 : i32, i32
  }
  func.func @transform_12(%arg0: i32) -> (i32, i32) {
    %c0_i32 = arith.constant 0 : i32
    %c0_i32_0 = arith.constant 0 : i32
    %c0_i32_1 = arith.constant 0 : i32
    return %c0_i32, %c0_i32_0 : i32, i32
  }
  func.func @transform_13(%arg0: i32) -> (i32, i32) {
    %c0_i32 = arith.constant 0 : i32
    %c0_i32_0 = arith.constant 0 : i32
    return %arg0, %c0_i32 : i32, i32
  }
}

</mosaic_0001>

<llo_original>
// kernel: tpu_custom_call.1
$region0: #{tpu_custom_call.1}
  #allocation0 [shape = 'u32[]', space=smem, size = 0x4, offset = 0x4, fixed_abs, tag = 'smem constant byte address 0x4 - core index']
  #allocation1 [shape = 'u32[144,128]{1,0:T(1,128)}', space=vmem, size = 0x12000, scoped, tag = 'internal scratch']
  %s0 = inlined_call_operand.hbm [shape: f32[16,32], index: 0, kind: input, shape index: {}]
  %s1 = inlined_call_operand.vmem [shape: f32[32,96], index: 1, kind: input, shape index: {}]
  %s2 = inlined_call_operand.vmem [shape: f32[1,96], index: 2, kind: input, shape index: {}]
  %s3 = inlined_call_operand.vmem [shape: f32[32,32], index: 3, kind: input, shape index: {}]
  %s4 = inlined_call_operand.vmem [shape: f32[1,32], index: 4, kind: input, shape index: {}]
  %s5 = inlined_call_operand.vmem [shape: f32[32,64], index: 5, kind: input, shape index: {}]
  %s6 = inlined_call_operand.vmem [shape: f32[1,64], index: 6, kind: input, shape index: {}]
  %s7 = inlined_call_operand.vmem [shape: f32[64,32], index: 7, kind: input, shape index: {}]
  %s8 = inlined_call_operand.vmem [shape: f32[1,32], index: 8, kind: input, shape index: {}]
  %s9 = inlined_call_operand.vmem [shape: f32[1,32], index: 9, kind: input, shape index: {}]
  %s10 = inlined_call_operand.vmem [shape: f32[1,32], index: 10, kind: input, shape index: {}]
  %s11 = inlined_call_operand.vmem [shape: f32[1,32], index: 11, kind: input, shape index: {}]
  %s12 = inlined_call_operand.vmem [shape: f32[1,32], index: 12, kind: input, shape index: {}]
  %s13 = inlined_call_operand.hbm [shape: f32[16,32], index: 13, kind: output, shape index: {}]
  %s14 = sld [smem:[#allocation0]]
  $region89: #{tpu_custom_call.1} parent=0
    _
  %s16 = ssub.s32 1, %s14
  %s17 = scalar_select 0, %s16, %s14
  $region1: #{tpu_custom_call.1} parent=0
    #allocation2 [shape = 'u8[8192]{0}', space=vmem, size = 0x2000, scoped, tag = 'input window, operand 0']
    #allocation3 [shape = 's32[2]{0}', space=sflag, size = 0x8, scoped, tag = 'scoped memory for tpu_custom_call.1']
    #allocation4 [shape = 's32[2]{0}', space=sflag, size = 0x8, scoped, tag = 'scoped memory for tpu_custom_call.1']
    #allocation5 [shape = 'u8[8192]{0}', space=vmem, size = 0x2000, scoped, tag = 'output window, operand 0']
    %18 = vsyncpa [#allocation3], 0
    %s19 = scalar_lea.sflag [#allocation3], 1
    %20 = vsyncpa %s19, 0
    %21 = vsyncpa [#allocation4], 0
    %s22 = scalar_lea.sflag [#allocation4], 1
    %23 = vsyncpa %s22, 0
    loop: start=0, step=1, limit=4
    $region2: #{tpu_custom_call.1} parent=1 // loop_pre_header
      _
    $region3: #{tpu_custom_call.1} parent=1 // loop_header
      %s25 = sphi 0, %s29
      %p26 = scmp.ge.s32.totalorder %s25, 4
      %s35 = sphi 0, %s37
      %s38 = sphi 0, %s35
      %s39 = sphi 0, %s38
      %s55 = sphi 0, %s39
      %s59 = sphi 0, %s59
      %s61 = sphi 0, %s59
      %s62 = sphi 0, %s61
      %s76 = sphi 0, %s62
      %s80 = sphi 0, %s80
      %s82 = sphi 0, %s80
      %s83 = sphi 0, %s82
      %s97 = sphi 0, %s83
      %s101 = sphi 0, %s101
      %s103 = sphi 0, %s101
      %s104 = sphi 0, %s103
      %s118 = sphi 0, %s104
      %s122 = sphi 0, %s122
      %s124 = sphi 0, %s122
      %s125 = sphi 0, %s124
      %s139 = sphi 0, %s125
      %s143 = sphi 0, %s143
      %s145 = sphi 0, %s143
      %s146 = sphi 0, %s145
      %s160 = sphi 0, %s146
      %s164 = sphi 0, %s164
      %s166 = sphi 0, %s164
      %s167 = sphi 0, %s166
      %s181 = sphi 0, %s167
      %s185 = sphi 0, %s185
      %s187 = sphi 0, %s185
      %s188 = sphi 0, %s187
      %s202 = sphi 0, %s188
      %s206 = sphi 0, %s206
      %s208 = sphi 0, %s206
      %s209 = sphi 0, %s208
      %s223 = sphi 0, %s209
      %s227 = sphi 0, %s227
      %s229 = sphi 0, %s227
      %s230 = sphi 0, %s229
      %s244 = sphi 0, %s230
      %s248 = sphi 0, %s248
      %s250 = sphi 0, %s248
      %s251 = sphi 0, %s250
      %s265 = sphi 0, %s251
      %s269 = sphi 0, %s269
      %s271 = sphi 0, %s269
      %s272 = sphi 0, %s271
      %s286 = sphi 0, %s272
      %s290 = sphi 0, %s290
      %s292 = sphi 0, %s290
      %s293 = sphi 0, %s292
      %s307 = sphi 0, %s293
      %s313 = sphi 0, %s315
      %s316 = sphi 0, %s313
      %s317 = sphi 0, %s316
      %s333 = sphi 0, %s317
    $region4: #{tpu_custom_call.1} parent=1 // loop_header_branch
      %28 = sbr.rel (%p26) target = $region8
    $region5: #{tpu_custom_call.1} parent=1 // loop_body
      %s30 = ssub.s32 %s25, 1
      %s31 = ssub.s32 %s25, 2
      %s32 = sadd.s32 %s25, 1
      %s33 = ssub.s32 %s25, %s32
      %p34 = scmp.eq.s32.totalorder %s33, 0
      %s36 = sadd.s32 %s35, 1
      %s37 = scalar_select %p34, %s35, %s36
      %p40 = pneg %p34
      %p41 = scmp.eq.s32.totalorder %s25, 1
      %p42 = por %p40, %p41
      %p43 = scmp.ne.s32.totalorder %s35, %s38
      %p44 = scmp.eq.s32.totalorder %s25, 0
      %p45 = por %p43, %p44
      %p46 = scmp.ne.s32.totalorder %s35, %s38
      %p47 = scmp.eq.s32.totalorder %s30, 1
      %p48 = por %p46, %p47
      %p49 = scmp.ne.s32.totalorder %s38, %s39
      %p50 = scmp.eq.s32.totalorder %s30, 0
      %p51 = por %p49, %p50
      %p52 = scmp.ne.s32.totalorder %s38, %s39
      %p53 = scmp.eq.s32.totalorder %s31, 1
      %p54 = por %p52, %p53
      %p56 = scmp.ne.s32.totalorder %s39, %s55
      %p57 = scmp.eq.s32.totalorder %s31, 0
      %p58 = por %p56, %p57
      %s60 = sadd.s32 %s59, 1
      %p63 = scmp.eq.s32.totalorder %s25, 1
      %p64 = scmp.ne.s32.totalorder %s59, %s61
      %p65 = scmp.eq.s32.totalorder %s25, 0
      %p66 = por %p64, %p65
      %p67 = scmp.ne.s32.totalorder %s59, %s61
      %p68 = scmp.eq.s32.totalorder %s30, 1
      %p69 = por %p67, %p68
      %p70 = scmp.ne.s32.totalorder %s61, %s62
      %p71 = scmp.eq.s32.totalorder %s30, 0
      %p72 = por %p70, %p71
      %p73 = scmp.ne.s32.totalorder %s61, %s62
      %p74 = scmp.eq.s32.totalorder %s31, 1
      %p75 = por %p73, %p74
      %p77 = scmp.ne.s32.totalorder %s62, %s76
      %p78 = scmp.eq.s32.totalorder %s31, 0
      %p79 = por %p77, %p78
      %s81 = sadd.s32 %s80, 1
      %p84 = scmp.eq.s32.totalorder %s25, 1
      %p85 = scmp.ne.s32.totalorder %s80, %s82
      %p86 = scmp.eq.s32.totalorder %s25, 0
      %p87 = por %p85, %p86
      %p88 = scmp.ne.s32.totalorder %s80, %s82
      %p89 = scmp.eq.s32.totalorder %s30, 1
      %p90 = por %p88, %p89
      %p91 = scmp.ne.s32.totalorder %s82, %s83
      %p92 = scmp.eq.s32.totalorder %s30, 0
      %p93 = por %p91, %p92
      %p94 = scmp.ne.s32.totalorder %s82, %s83
      %p95 = scmp.eq.s32.totalorder %s31, 1
      %p96 = por %p94, %p95
      %p98 = scmp.ne.s32.totalorder %s83, %s97
      %p99 = scmp.eq.s32.totalorder %s31, 0
      %p100 = por %p98, %p99
      %s102 = sadd.s32 %s101, 1
      %p105 = scmp.eq.s32.totalorder %s25, 1
      %p106 = scmp.ne.s32.totalorder %s101, %s103
      %p107 = scmp.eq.s32.totalorder %s25, 0
      %p108 = por %p106, %p107
      %p109 = scmp.ne.s32.totalorder %s101, %s103
      %p110 = scmp.eq.s32.totalorder %s30, 1
      %p111 = por %p109, %p110
      %p112 = scmp.ne.s32.totalorder %s103, %s104
      %p113 = scmp.eq.s32.totalorder %s30, 0
      %p114 = por %p112, %p113
      %p115 = scmp.ne.s32.totalorder %s103, %s104
      %p116 = scmp.eq.s32.totalorder %s31, 1
      %p117 = por %p115, %p116
      %p119 = scmp.ne.s32.totalorder %s104, %s118
      %p120 = scmp.eq.s32.totalorder %s31, 0
      %p121 = por %p119, %p120
      %s123 = sadd.s32 %s122, 1
      %p126 = scmp.eq.s32.totalorder %s25, 1
      %p127 = scmp.ne.s32.totalorder %s122, %s124
      %p128 = scmp.eq.s32.totalorder %s25, 0
      %p129 = por %p127, %p128
      %p130 = scmp.ne.s32.totalorder %s122, %s124
      %p131 = scmp.eq.s32.totalorder %s30, 1
      %p132 = por %p130, %p131
      %p133 = scmp.ne.s32.totalorder %s124, %s125
      %p134 = scmp.eq.s32.totalorder %s30, 0
      %p135 = por %p133, %p134
      %p136 = scmp.ne.s32.totalorder %s124, %s125
      %p137 = scmp.eq.s32.totalorder %s31, 1
      %p138 = por %p136, %p137
      %p140 = scmp.ne.s32.totalorder %s125, %s139
      %p141 = scmp.eq.s32.totalorder %s31, 0
      %p142 = por %p140, %p141
      %s144 = sadd.s32 %s143, 1
      %p147 = scmp.eq.s32.totalorder %s25, 1
      %p148 = scmp.ne.s32.totalorder %s143, %s145
      %p149 = scmp.eq.s32.totalorder %s25, 0
      %p150 = por %p148, %p149
      %p151 = scmp.ne.s32.totalorder %s143, %s145
      %p152 = scmp.eq.s32.totalorder %s30, 1
      %p153 = por %p151, %p152
      %p154 = scmp.ne.s32.totalorder %s145, %s146
      %p155 = scmp.eq.s32.totalorder %s30, 0
      %p156 = por %p154, %p155
      %p157 = scmp.ne.s32.totalorder %s145, %s146
      %p158 = scmp.eq.s32.totalorder %s31, 1
      %p159 = por %p157, %p158
      %p161 = scmp.ne.s32.totalorder %s146, %s160
      %p162 = scmp.eq.s32.totalorder %s31, 0
      %p163 = por %p161, %p162
      %s165 = sadd.s32 %s164, 1
      %p168 = scmp.eq.s32.totalorder %s25, 1
      %p169 = scmp.ne.s32.totalorder %s164, %s166
      %p170 = scmp.eq.s32.totalorder %s25, 0
      %p171 = por %p169, %p170
      %p172 = scmp.ne.s32.totalorder %s164, %s166
      %p173 = scmp.eq.s32.totalorder %s30, 1
      %p174 = por %p172, %p173
      %p175 = scmp.ne.s32.totalorder %s166, %s167
      %p176 = scmp.eq.s32.totalorder %s30, 0
      %p177 = por %p175, %p176
      %p178 = scmp.ne.s32.totalorder %s166, %s167
      %p179 = scmp.eq.s32.totalorder %s31, 1
      %p180 = por %p178, %p179
      %p182 = scmp.ne.s32.totalorder %s167, %s181
      %p183 = scmp.eq.s32.totalorder %s31, 0
      %p184 = por %p182, %p183
      %s186 = sadd.s32 %s185, 1
      %p189 = scmp.eq.s32.totalorder %s25, 1
      %p190 = scmp.ne.s32.totalorder %s185, %s187
      %p191 = scmp.eq.s32.totalorder %s25, 0
      %p192 = por %p190, %p191
      %p193 = scmp.ne.s32.totalorder %s185, %s187
      %p194 = scmp.eq.s32.totalorder %s30, 1
      %p195 = por %p193, %p194
      %p196 = scmp.ne.s32.totalorder %s187, %s188
      %p197 = scmp.eq.s32.totalorder %s30, 0
      %p198 = por %p196, %p197
      %p199 = scmp.ne.s32.totalorder %s187, %s188
      %p200 = scmp.eq.s32.totalorder %s31, 1
      %p201 = por %p199, %p200
      %p203 = scmp.ne.s32.totalorder %s188, %s202
      %p204 = scmp.eq.s32.totalorder %s31, 0
      %p205 = por %p203, %p204
      %s207 = sadd.s32 %s206, 1
      %p210 = scmp.eq.s32.totalorder %s25, 1
      %p211 = scmp.ne.s32.totalorder %s206, %s208
      %p212 = scmp.eq.s32.totalorder %s25, 0
      %p213 = por %p211, %p212
      %p214 = scmp.ne.s32.totalorder %s206, %s208
      %p215 = scmp.eq.s32.totalorder %s30, 1
      %p216 = por %p214, %p215
      %p217 = scmp.ne.s32.totalorder %s208, %s209
      %p218 = scmp.eq.s32.totalorder %s30, 0
      %p219 = por %p217, %p218
      %p220 = scmp.ne.s32.totalorder %s208, %s209
      %p221 = scmp.eq.s32.totalorder %s31, 1
      %p222 = por %p220, %p221
      %p224 = scmp.ne.s32.totalorder %s209, %s223
      %p225 = scmp.eq.s32.totalorder %s31, 0
      %p226 = por %p224, %p225
      %s228 = sadd.s32 %s227, 1
      %p231 = scmp.eq.s32.totalorder %s25, 1
      %p232 = scmp.ne.s32.totalorder %s227, %s229
      %p233 = scmp.eq.s32.totalorder %s25, 0
      %p234 = por %p232, %p233
      %p235 = scmp.ne.s32.totalorder %s227, %s229
      %p236 = scmp.eq.s32.totalorder %s30, 1
      %p237 = por %p235, %p236
      %p238 = scmp.ne.s32.totalorder %s229, %s230
      %p239 = scmp.eq.s32.totalorder %s30, 0
      %p240 = por %p238, %p239
      %p241 = scmp.ne.s32.totalorder %s229, %s230
      %p242 = scmp.eq.s32.totalorder %s31, 1
      %p243 = por %p241, %p242
      %p245 = scmp.ne.s32.totalorder %s230, %s244
      %p246 = scmp.eq.s32.totalorder %s31, 0
      %p247 = por %p245, %p246
      %s249 = sadd.s32 %s248, 1
      %p252 = scmp.eq.s32.totalorder %s25, 1
      %p253 = scmp.ne.s32.totalorder %s248, %s250
      %p254 = scmp.eq.s32.totalorder %s25, 0
      %p255 = por %p253, %p254
      %p256 = scmp.ne.s32.totalorder %s248, %s250
      %p257 = scmp.eq.s32.totalorder %s30, 1
      %p258 = por %p256, %p257
      %p259 = scmp.ne.s32.totalorder %s250, %s251
      %p260 = scmp.eq.s32.totalorder %s30, 0
      %p261 = por %p259, %p260
      %p262 = scmp.ne.s32.totalorder %s250, %s251
      %p263 = scmp.eq.s32.totalorder %s31, 1
      %p264 = por %p262, %p263
      %p266 = scmp.ne.s32.totalorder %s251, %s265
      %p267 = scmp.eq.s32.totalorder %s31, 0
      %p268 = por %p266, %p267
      %s270 = sadd.s32 %s269, 1
      %p273 = scmp.eq.s32.totalorder %s25, 1
      %p274 = scmp.ne.s32.totalorder %s269, %s271
      %p275 = scmp.eq.s32.totalorder %s25, 0
      %p276 = por %p274, %p275
      %p277 = scmp.ne.s32.totalorder %s269, %s271
      %p278 = scmp.eq.s32.totalorder %s30, 1
      %p279 = por %p277, %p278
      %p280 = scmp.ne.s32.totalorder %s271, %s272
      %p281 = scmp.eq.s32.totalorder %s30, 0
      %p282 = por %p280, %p281
      %p283 = scmp.ne.s32.totalorder %s271, %s272
      %p284 = scmp.eq.s32.totalorder %s31, 1
      %p285 = por %p283, %p284
      %p287 = scmp.ne.s32.totalorder %s272, %s286
      %p288 = scmp.eq.s32.totalorder %s31, 0
      %p289 = por %p287, %p288
      %s291 = sadd.s32 %s290, 1
      %p294 = scmp.eq.s32.totalorder %s25, 1
      %p295 = scmp.ne.s32.totalorder %s290, %s292
      %p296 = scmp.eq.s32.totalorder %s25, 0
      %p297 = por %p295, %p296
      %p298 = scmp.ne.s32.totalorder %s290, %s292
      %p299 = scmp.eq.s32.totalorder %s30, 1
      %p300 = por %p298, %p299
      %p301 = scmp.ne.s32.totalorder %s292, %s293
      %p302 = scmp.eq.s32.totalorder %s30, 0
      %p303 = por %p301, %p302
      %p304 = scmp.ne.s32.totalorder %s292, %s293
      %p305 = scmp.eq.s32.totalorder %s31, 1
      %p306 = por %p304, %p305
      %p308 = scmp.ne.s32.totalorder %s293, %s307
      %p309 = scmp.eq.s32.totalorder %s31, 0
      %p310 = por %p308, %p309
      %s311 = ssub.s32 %s25, %s32
      %p312 = scmp.eq.s32.totalorder %s311, 0
      %s314 = sadd.s32 %s313, 1
      %s315 = scalar_select %p312, %s313, %s314
      %p318 = pneg %p312
      %p319 = scmp.eq.s32.totalorder %s25, 1
      %p320 = por %p318, %p319
      %p321 = scmp.ne.s32.totalorder %s313, %s316
      %p322 = scmp.eq.s32.totalorder %s25, 0
      %p323 = por %p321, %p322
      %p324 = scmp.ne.s32.totalorder %s313, %s316
      %p325 = scmp.eq.s32.totalorder %s30, 1
      %p326 = por %p324, %p325
      %p327 = scmp.ne.s32.totalorder %s316, %s317
      %p328 = scmp.eq.s32.totalorder %s30, 0
      %p329 = por %p327, %p328
      %p330 = scmp.ne.s32.totalorder %s316, %s317
      %p331 = scmp.eq.s32.totalorder %s31, 1
      %p332 = por %p330, %p331
      %p334 = scmp.ne.s32.totalorder %s317, %s333
      %p335 = scmp.eq.s32.totalorder %s31, 0
      %p336 = por %p334, %p335
      %p337 = scmp.le.s32.totalorder 1, %s25
      %p338 = scmp.lt.s32.totalorder %s25, 3
      %p339 = pnand %p337, %p338
      %p340 = pneg %p339
      // Predicated region
      $region9: #{tpu_custom_call.1} parent=5 // pred_check
        _
      $region10: #{tpu_custom_call.1} parent=5 // pred_check_branch
        %342 = sbr.rel (%p339) target = $region12
      $region11: #{tpu_custom_call.1} parent=5 // pred_region
        %s343 = ssub.s32 %s25, 1
        // Predicated region
        $region13: #{tpu_custom_call.1} parent=11 // pred_check
          %p344 = pneg %p72
        $region14: #{tpu_custom_call.1} parent=11 // pred_check_branch
          %346 = sbr.rel (%p344) target = $region16
        $region15: #{tpu_custom_call.1} parent=11 // pred_region
          _
        $region16: #{tpu_custom_call.1} parent=11 // pred_fallthru
          _
        // Predicated region
        $region17: #{tpu_custom_call.1} parent=11 // pred_check
          %p347 = pneg %p93
        $region18: #{tpu_custom_call.1} parent=11 // pred_check_branch
          %349 = sbr.rel (%p347) target = $region20
        $region19: #{tpu_custom_call.1} parent=11 // pred_region
          _
        $region20: #{tpu_custom_call.1} parent=11 // pred_fallthru
          _
        // Predicated region
        $region21: #{tpu_custom_call.1} parent=11 // pred_check
          %p350 = pneg %p114
        $region22: #{tpu_custom_call.1} parent=11 // pred_check_branch
          %352 = sbr.rel (%p350) target = $region24
        $region23: #{tpu_custom_call.1} parent=11 // pred_region
          _
        $region24: #{tpu_custom_call.1} parent=11 // pred_fallthru
          _
        // Predicated region
        $region25: #{tpu_custom_call.1} parent=11 // pred_check
          %p353 = pneg %p135
        $region26: #{tpu_custom_call.1} parent=11 // pred_check_branch
          %355 = sbr.rel (%p353) target = $region28
        $region27: #{tpu_custom_call.1} parent=11 // pred_region
          _
        $region28: #{tpu_custom_call.1} parent=11 // pred_fallthru
          _
        // Predicated region
        $region29: #{tpu_custom_call.1} parent=11 // pred_check
          %p356 = pneg %p156
        $region30: #{tpu_custom_call.1} parent=11 // pred_check_branch
          %358 = sbr.rel (%p356) target = $region32
        $region31: #{tpu_custom_call.1} parent=11 // pred_region
          _
        $region32: #{tpu_custom_call.1} parent=11 // pred_fallthru
          _
        // Predicated region
        $region33: #{tpu_custom_call.1} parent=11 // pred_check
          %p359 = pneg %p177
        $region34: #{tpu_custom_call.1} parent=11 // pred_check_branch
          %361 = sbr.rel (%p359) target = $region36
        $region35: #{tpu_custom_call.1} parent=11 // pred_region
          _
        $region36: #{tpu_custom_call.1} parent=11 // pred_fallthru
          _
        // Predicated region
        $region37: #{tpu_custom_call.1} parent=11 // pred_check
          %p362 = pneg %p198
        $region38: #{tpu_custom_call.1} parent=11 // pred_check_branch
          %364 = sbr.rel (%p362) target = $region40
        $region39: #{tpu_custom_call.1} parent=11 // pred_region
          _
        $region40: #{tpu_custom_call.1} parent=11 // pred_fallthru
          _
        // Predicated region
        $region41: #{tpu_custom_call.1} parent=11 // pred_check
          %p365 = pneg %p219
        $region42: #{tpu_custom_call.1} parent=11 // pred_check_branch
          %367 = sbr.rel (%p365) target = $region44
        $region43: #{tpu_custom_call.1} parent=11 // pred_region
          _
        $region44: #{tpu_custom_call.1} parent=11 // pred_fallthru
          _
        // Predicated region
        $region45: #{tpu_custom_call.1} parent=11 // pred_check
          %p368 = pneg %p240
        $region46: #{tpu_custom_call.1} parent=11 // pred_check_branch
          %370 = sbr.rel (%p368) target = $region48
        $region47: #{tpu_custom_call.1} parent=11 // pred_region
          _
        $region48: #{tpu_custom_call.1} parent=11 // pred_fallthru
          _
        // Predicated region
        $region49: #{tpu_custom_call.1} parent=11 // pred_check
          %p371 = pneg %p261
        $region50: #{tpu_custom_call.1} parent=11 // pred_check_branch
          %373 = sbr.rel (%p371) target = $region52
        $region51: #{tpu_custom_call.1} parent=11 // pred_region
          _
        $region52: #{tpu_custom_call.1} parent=11 // pred_fallthru
          _
        // Predicated region
        $region53: #{tpu_custom_call.1} parent=11 // pred_check
          %p374 = pneg %p282
        $region54: #{tpu_custom_call.1} parent=11 // pred_check_branch
          %376 = sbr.rel (%p374) target = $region56
        $region55: #{tpu_custom_call.1} parent=11 // pred_region
          _
        $region56: #{tpu_custom_call.1} parent=11 // pred_fallthru
          _
        // Predicated region
        $region57: #{tpu_custom_call.1} parent=11 // pred_check
          %p377 = pneg %p303
        $region58: #{tpu_custom_call.1} parent=11 // pred_check_branch
          %379 = sbr.rel (%p377) target = $region60
        $region59: #{tpu_custom_call.1} parent=11 // pred_region
          _
        $region60: #{tpu_custom_call.1} parent=11 // pred_fallthru
          _
      $region12: #{tpu_custom_call.1} parent=5 // pred_fallthru
        _
      %p380 = scmp.lt.s32.totalorder %s25, 2
      // Predicated region
      $region61: #{tpu_custom_call.1} parent=5 // pred_check
        %p381 = pneg %p380
      $region62: #{tpu_custom_call.1} parent=5 // pred_check_branch
        %383 = sbr.rel (%p381) target = $region64
      $region63: #{tpu_custom_call.1} parent=5 // pred_region
        // Predicated region
        $region65: #{tpu_custom_call.1} parent=63 // pred_check
          %p384 = pneg %p45
        $region66: #{tpu_custom_call.1} parent=63 // pred_check_branch
          %386 = sbr.rel (%p384) target = $region68
        $region67: #{tpu_custom_call.1} parent=63 // pred_region
          %s387 = sand.u32 %s35, 1
          %s388 = scalar_lea.sflag [#allocation3], %s387
          %s389 = sand.u32 %s35, 1
          %s390 = smul.addr %s389, 8
          %s391 = scalar_lea.vmem [#allocation2], %s390
          %s393 = ssub.s32 128, 128
          %394 = vsyncadd %s388, %s393
          %s395 = smul.addr %s25, 128
          %s396 = scalar_lea.hbm %s0, %s395
          %s398 = sshll.u32 %s391, 4
          %s399 = int_to_ptr.vmem [resolvable:$true] %s398
          %401 = dma.hbm_to_vmem [thread:$0]  %s396, 128, %s399, %s388
        $region68: #{tpu_custom_call.1} parent=63 // pred_fallthru
          _
      $region64: #{tpu_custom_call.1} parent=5 // pred_fallthru
        _
      %p402 = scmp.le.s32.totalorder 1, %s25
      %p403 = scmp.lt.s32.totalorder %s25, 3
      %p404 = pnand %p402, %p403
      %p405 = pneg %p404
      // Predicated region
      $region69: #{tpu_custom_call.1} parent=5 // pred_check
        _
      $region70: #{tpu_custom_call.1} parent=5 // pred_check_branch
        %407 = sbr.rel (%p404) target = $region72
      $region71: #{tpu_custom_call.1} parent=5 // pred_region
        %s408 = ssub.s32 %s25, 1
        %s409 = sand.u32 %s38, 1
        %s410 = scalar_lea.sflag [#allocation3], %s409
        %s411 = sand.u32 %s38, 1
        %s412 = smul.addr %s411, 8
        %s413 = scalar_lea.vmem [#allocation2], %s412
        // Predicated region
        $region73: #{tpu_custom_call.1} parent=71 // pred_check
          %p414 = pneg %p51
        $region74: #{tpu_custom_call.1} parent=71 // pred_check_branch
          %416 = sbr.rel (%p414) target = $region76
        $region75: #{tpu_custom_call.1} parent=71 // pred_region
          %417 = dma.done %s410, 128
        $region76: #{tpu_custom_call.1} parent=71 // pred_fallthru
          _
        %s418 = sand.u32 %s38, 1
        %s419 = scalar_lea.sflag [#allocation3], %s418
        %s420 = sand.u32 %s38, 1
        %s421 = smul.addr %s420, 8
        %s422 = scalar_lea.vmem [#allocation2], %s421
        %p423 = pneg %p51
        %p424 = pneg %p48
        %p425 = pneg %p72
        %p426 = pneg %p69
        %p427 = pneg %p93
        %p428 = pneg %p90
        %p429 = pneg %p114
        %p430 = pneg %p111
        %p431 = pneg %p135
        %p432 = pneg %p132
        %p433 = pneg %p156
        %p434 = pneg %p153
        %p435 = pneg %p177
        %p436 = pneg %p174
        %p437 = pneg %p198
        %p438 = pneg %p195
        %p439 = pneg %p219
        %p440 = pneg %p216
        %p441 = pneg %p240
        %p442 = pneg %p237
        %p443 = pneg %p261
        %p444 = pneg %p258
        %p445 = pneg %p282
        %p446 = pneg %p279
        %p447 = pneg %p303
        %p448 = pneg %p300
        %p449 = pneg %p329
        %p450 = pneg %p326
        %s451 = sand.u32 %s316, 1
        %s452 = scalar_lea.sflag [#allocation4], %s451
        %s453 = sand.u32 %s316, 1
        %s454 = smul.addr %s453, 8
        %s455 = scalar_lea.vmem [#allocation5], %s454
        %v456 = vld [vmem:[%s413] sm:$0xff]
        %v457 = vld [vmem:[%s9] sm:$0x1]
        %v458 = vld [vmem:[%s10] sm:$0x1]
        %vm459 = vcmask 261120
        %v460 = vsel %vm459, %v456, 0.0
        %461 = vadd.xlane.f32.xlu0 %v460
        %v462 = vpop.xlane.xlu0 %461
        %v463 = vrcp.pop 32.0
        %v464 = vmul.f32 %v462, %v463
        %v465 = vsub.f32 %v456, %v464
        %v466 = vmul.f32 %v465, %v465
        %v467 = vsel %vm459, %v466, 0.0
        %468 = vadd.xlane.f32.xlu0 %v467
        %v469 = vpop.xlane.xlu0 %468
        %v470 = vmul.f32 %v469, %v463
        %v471 = vadd.f32 %v470, 1e-05
        %v472 = vrsqrt.pop %v471
        %v473 = vmul.f32 %v465, %v472
        %v475 = vlaneseq
        %v476 = vshrl.u32 %v475, 7
        %v477 = vsub.s32 0, %v476
        %v478 = vrot.slane %v457, %v477
        %v480 = vmul.f32 %v473, %v478
        %v482 = vlaneseq
        %v483 = vshrl.u32 %v482, 7
        %v484 = vsub.s32 0, %v483
        %v485 = vrot.slane %v458, %v484
        %v487 = vadd.f32 %v480, %v485
        %v488 = vld [vmem:[%s1] sm:$0xff]
        %v489 = vld [vmem:[%s1 + $0x8] sm:$0xff]
        %v490 = vld [vmem:[%s1 + $0x10] sm:$0xff]
        %v491 = vld [vmem:[%s1 + $0x18] sm:$0xff]
        %v492 = vld [vmem:[%s2] sm:$0x1]
        %v494 = vlaneseq
        %v495 = vshrl.u32 %v494, 7
        %v496 = vsub.s32 0, %v495
        %v497 = vrot.slane %v492, %v496
        %v500 = vsel %vm459, %v487, 0
        %502 = vmatprep.subr.mxu0 0.0
        %503 = vmatpush1.msra.mxu0 %v488
        %504 = vmatprep.subr.mxu0 0.0
        %505 = vmatpush1.msra.mxu0 %v489
        %506 = vmatprep.subr.mxu0 0.0
        %507 = vmatpush1.msra.mxu0 %v490
        %508 = vmatprep.subr.mxu0 0.0
        %509 = vmatpush1.msra.mxu0 %v491
        %510 = vmatprep.subr.mxu0 0.0
        %511 = vmatpush1.msra.mxu0 0.0
        %512 = vmatprep.subr.mxu0 0.0
        %513 = vmatpush1.msra.mxu0 0.0
        %514 = vmatprep.subr.mxu0 0.0
        %515 = vmatpush1.msra.mxu0 0.0
        %516 = vmatprep.subr.mxu0 0.0
        %517 = vmatpush1.msra.mxu0 0.0
        %518 = vmatprep.subr.mxu0 0.0
        %519 = vmatpush1.msra.mxu0 0.0
        %520 = vmatprep.subr.mxu0 0.0
        %521 = vmatpush1.msra.mxu0 0.0
        %522 = vmatprep.subr.mxu0 0.0
        %523 = vmatpush1.msra.mxu0 0.0
        %524 = vmatprep.subr.mxu0 0.0
        %525 = vmatpush1.msra.mxu0 0.0
        %526 = vmatprep.subr.mxu0 0.0
        %527 = vmatpush1.msra.mxu0 0.0
        %528 = vmatprep.subr.mxu0 0.0
        %529 = vmatpush1.msra.mxu0 0.0
        %530 = vmatprep.subr.mxu0 0.0
        %531 = vmatpush1.msra.mxu0 0.0
        %532 = vmatprep.subr.mxu0 0.0
        %533 = vmatpush1.msra.mxu0 0.0
        %534 = vmatprep.subr.mxu0 0.0
        %535 = vmatpush1.msra.mxu0 0.0
        %536 = vmatprep.subr.mxu0 0.0
        %537 = vmatpush1.msra.mxu0 0.0
        %538 = vmatprep.subr.mxu0 0.0
        %539 = vmatpush1.msra.mxu0 0.0
        %540 = vmatprep.subr.mxu0 0.0
        %541 = vmatpush1.msra.mxu0 0.0
        %542 = vmatprep.subr.mxu0 0.0
        %543 = vmatpush1.msra.mxu0 0.0
        %544 = vmatprep.subr.mxu0 0.0
        %545 = vmatpush1.msra.mxu0 0.0
        %546 = vmatprep.subr.mxu0 0.0
        %547 = vmatpush1.msra.mxu0 0.0
        %548 = vmatprep.subr.mxu0 0.0
        %549 = vmatpush1.msra.mxu0 0.0
        %550 = vmatprep.subr.mxu0 0.0
        %551 = vmatpush1.msra.mxu0 0.0
        %552 = vmatprep.subr.mxu0 0.0
        %553 = vmatpush1.msra.mxu0 0.0
        %554 = vmatprep.subr.mxu0 0.0
        %555 = vmatpush1.msra.mxu0 0.0
        %556 = vmatprep.subr.mxu0 0.0
        %557 = vmatpush1.msra.mxu0 0.0
        %558 = vmatprep.subr.mxu0 0.0
        %559 = vmatpush1.msra.mxu0 0.0
        %560 = vmatprep.subr.mxu0 0.0
        %561 = vmatpush1.msra.mxu0 0.0
        %562 = vmatprep.subr.mxu0 0.0
        %563 = vmatpush1.msra.mxu0 0.0
        %564 = vmatprep.subr.mxu0 0.0
        %565 = vmatpush1.msra.mxu0 0.0
        %566 = vmatprep.mubr.f32.mxu0 0.0
        %567 = vmatmul.mubr.f32.gmra.mrb[0].mxu0 %v500
        %v568 = vpop.f32.mrb[0].mxu0
        %v569 = vadd.f32 %v497, %v568
        %v570 = vpop.f32.mrb[0].mxu0
        %571 = vdwg.mxu0
        %v572 = vmul.f32 %v569, 0.35355338
        %574 = vrot.lane.b32.xlu0 %v572, 120
        %v575 = vpop.permute.xlu0 %574
        %576 = vrot.lane.b32.xlu0 %v572, 112
        %v577 = vpop.permute.xlu0 %576
        %578 = vrot.lane.b32.xlu0 %v572, 104
        %v579 = vpop.permute.xlu0 %578
        %581 = vrot.lane.b32.xlu0 %v569, 120
        %v582 = vpop.permute.xlu0 %581
        %583 = vrot.lane.b32.xlu0 %v569, 112
        %v584 = vpop.permute.xlu0 %583
        %585 = vrot.lane.b32.xlu0 %v569, 104
        %v586 = vpop.permute.xlu0 %585
        %587 = vrot.lane.b32.xlu0 %v569, 96
        %v588 = vpop.permute.xlu0 %587
        %vm589 = vcmask 64512
        %v590 = vsel %vm589, %v572, 0
        %v592 = vsel %vm589, %v588, 0
        %594 = vmatprep.subr.mxu0 0.0
        %595 = vmatpush1.xpose.msra.mxu0 %v592
        %596 = vmatprep.subr.mxu0 0.0
        %597 = vmatpush1.xpose.msra.mxu0 0.0
        %598 = vmatprep.subr.mxu0 0.0
        %599 = vmatpush1.xpose.msra.mxu0 0.0
        %600 = vmatprep.subr.mxu0 0.0
        %601 = vmatpush1.xpose.msra.mxu0 0.0
        %602 = vmatprep.subr.mxu0 0.0
        %603 = vmatpush1.xpose.msra.mxu0 0.0
        %604 = vmatprep.subr.mxu0 0.0
        %605 = vmatpush1.xpose.msra.mxu0 0.0
        %606 = vmatprep.subr.mxu0 0.0
        %607 = vmatpush1.xpose.msra.mxu0 0.0
        %608 = vmatprep.subr.mxu0 0.0
        %609 = vmatpush1.xpose.msra.mxu0 0.0
        %610 = vmatprep.subr.mxu0 0.0
        %611 = vmatpush1.xpose.msra.mxu0 0.0
        %612 = vmatprep.subr.mxu0 0.0
        %613 = vmatpush1.xpose.msra.mxu0 0.0
        %614 = vmatprep.subr.mxu0 0.0
        %615 = vmatpush1.xpose.msra.mxu0 0.0
        %616 = vmatprep.subr.mxu0 0.0
        %617 = vmatpush1.xpose.msra.mxu0 0.0
        %618 = vmatprep.subr.mxu0 0.0
        %619 = vmatpush1.xpose.msra.mxu0 0.0
        %620 = vmatprep.subr.mxu0 0.0
        %621 = vmatpush1.xpose.msra.mxu0 0.0
        %622 = vmatprep.subr.mxu0 0.0
        %623 = vmatpush1.xpose.msra.mxu0 0.0
        %624 = vmatprep.subr.mxu0 0.0
        %625 = vmatpush1.xpose.msra.mxu0 0.0
        %626 = vmatprep.subr.mxu0 0.0
        %627 = vmatpush1.xpose.msra.mxu0 0.0
        %628 = vmatprep.subr.mxu0 0.0
        %629 = vmatpush1.xpose.msra.mxu0 0.0
        %630 = vmatprep.subr.mxu0 0.0
        %631 = vmatpush1.xpose.msra.mxu0 0.0
        %632 = vmatprep.subr.mxu0 0.0
        %633 = vmatpush1.xpose.msra.mxu0 0.0
        %634 = vmatprep.subr.mxu0 0.0
        %635 = vmatpush1.xpose.msra.mxu0 0.0
        %636 = vmatprep.subr.mxu0 0.0
        %637 = vmatpush1.xpose.msra.mxu0 0.0
        %638 = vmatprep.subr.mxu0 0.0
        %639 = vmatpush1.xpose.msra.mxu0 0.0
        %640 = vmatprep.subr.mxu0 0.0
        %641 = vmatpush1.xpose.msra.mxu0 0.0
        %642 = vmatprep.subr.mxu0 0.0
        %643 = vmatpush1.xpose.msra.mxu0 0.0
        %644 = vmatprep.subr.mxu0 0.0
        %645 = vmatpush1.xpose.msra.mxu0 0.0
        %646 = vmatprep.subr.mxu0 0.0
        %647 = vmatpush1.xpose.msra.mxu0 0.0
        %648 = vmatprep.subr.mxu0 0.0
        %649 = vmatpush1.xpose.msra.mxu0 0.0
        %650 = vmatprep.subr.mxu0 0.0
        %651 = vmatpush1.xpose.msra.mxu0 0.0
        %652 = vmatprep.subr.mxu0 0.0
        %653 = vmatpush1.xpose.msra.mxu0 0.0
        %654 = vmatprep.subr.mxu0 0.0
        %655 = vmatpush1.xpose.msra.mxu0 0.0
        %656 = vmatprep.subr.mxu0 0.0
        %657 = vmatpush1.xpose.msra.mxu0 0.0
        %658 = vmatprep.mubr.f32.mxu0 0.0
        %659 = vmatmul.mubr.f32.gmra.mrb[0].mxu0 %v590
        %v660 = vpop.f32.mrb[0].mxu0
        %v661 = vadd.f32 0.0, %v660
        %v662 = vpop.f32.mrb[0].mxu0
        %663 = vdwg.mxu0
        %664 = vrot.lane.b32.xlu0 %v582, 96
        %v665 = vpop.permute.xlu0 %664
        %v666 = vsel %vm589, %v575, 0
        %v668 = vsel %vm589, %v665, 0
        %670 = vmatprep.subr.mxu0 0.0
        %671 = vmatpush1.xpose.msra.mxu0 %v668
        %672 = vmatprep.subr.mxu0 0.0
        %673 = vmatpush1.xpose.msra.mxu0 0.0
        %674 = vmatprep.subr.mxu0 0.0
        %675 = vmatpush1.xpose.msra.mxu0 0.0
        %676 = vmatprep.subr.mxu0 0.0
        %677 = vmatpush1.xpose.msra.mxu0 0.0
        %678 = vmatprep.subr.mxu0 0.0
        %679 = vmatpush1.xpose.msra.mxu0 0.0
        %680 = vmatprep.subr.mxu0 0.0
        %681 = vmatpush1.xpose.msra.mxu0 0.0
        %682 = vmatprep.subr.mxu0 0.0
        %683 = vmatpush1.xpose.msra.mxu0 0.0
        %684 = vmatprep.subr.mxu0 0.0
        %685 = vmatpush1.xpose.msra.mxu0 0.0
        %686 = vmatprep.subr.mxu0 0.0
        %687 = vmatpush1.xpose.msra.mxu0 0.0
        %688 = vmatprep.subr.mxu0 0.0
        %689 = vmatpush1.xpose.msra.mxu0 0.0
        %690 = vmatprep.subr.mxu0 0.0
        %691 = vmatpush1.xpose.msra.mxu0 0.0
        %692 = vmatprep.subr.mxu0 0.0
        %693 = vmatpush1.xpose.msra.mxu0 0.0
        %694 = vmatprep.subr.mxu0 0.0
        %695 = vmatpush1.xpose.msra.mxu0 0.0
        %696 = vmatprep.subr.mxu0 0.0
        %697 = vmatpush1.xpose.msra.mxu0 0.0
        %698 = vmatprep.subr.mxu0 0.0
        %699 = vmatpush1.xpose.msra.mxu0 0.0
        %700 = vmatprep.subr.mxu0 0.0
        %701 = vmatpush1.xpose.msra.mxu0 0.0
        %702 = vmatprep.subr.mxu0 0.0
        %703 = vmatpush1.xpose.msra.mxu0 0.0
        %704 = vmatprep.subr.mxu0 0.0
        %705 = vmatpush1.xpose.msra.mxu0 0.0
        %706 = vmatprep.subr.mxu0 0.0
        %707 = vmatpush1.xpose.msra.mxu0 0.0
        %708 = vmatprep.subr.mxu0 0.0
        %709 = vmatpush1.xpose.msra.mxu0 0.0
        %710 = vmatprep.subr.mxu0 0.0
        %711 = vmatpush1.xpose.msra.mxu0 0.0
        %712 = vmatprep.subr.mxu0 0.0
        %713 = vmatpush1.xpose.msra.mxu0 0.0
        %714 = vmatprep.subr.mxu0 0.0
        %715 = vmatpush1.xpose.msra.mxu0 0.0
        %716 = vmatprep.subr.mxu0 0.0
        %717 = vmatpush1.xpose.msra.mxu0 0.0
        %718 = vmatprep.subr.mxu0 0.0
        %719 = vmatpush1.xpose.msra.mxu0 0.0
        %720 = vmatprep.subr.mxu0 0.0
        %721 = vmatpush1.xpose.msra.mxu0 0.0
        %722 = vmatprep.subr.mxu0 0.0
        %723 = vmatpush1.xpose.msra.mxu0 0.0
        %724 = vmatprep.subr.mxu0 0.0
        %725 = vmatpush1.xpose.msra.mxu0 0.0
        %726 = vmatprep.subr.mxu0 0.0
        %727 = vmatpush1.xpose.msra.mxu0 0.0
        %728 = vmatprep.subr.mxu0 0.0
        %729 = vmatpush1.xpose.msra.mxu0 0.0
        %730 = vmatprep.subr.mxu0 0.0
        %731 = vmatpush1.xpose.msra.mxu0 0.0
        %732 = vmatprep.subr.mxu0 0.0
        %733 = vmatpush1.xpose.msra.mxu0 0.0
        %734 = vmatprep.mubr.f32.mxu0 0.0
        %735 = vmatmul.mubr.f32.gmra.mrb[0].mxu0 %v666
        %v736 = vpop.f32.mrb[0].mxu0
        %v737 = vadd.f32 0.0, %v736
        %v738 = vpop.f32.mrb[0].mxu0
        %739 = vdwg.mxu0
        %740 = vrot.lane.b32.xlu0 %v584, 96
        %v741 = vpop.permute.xlu0 %740
        %v742 = vsel %vm589, %v577, 0
        %v744 = vsel %vm589, %v741, 0
        %746 = vmatprep.subr.mxu0 0.0
        %747 = vmatpush1.xpose.msra.mxu0 %v744
        %748 = vmatprep.subr.mxu0 0.0
        %749 = vmatpush1.xpose.msra.mxu0 0.0
        %750 = vmatprep.subr.mxu0 0.0
        %751 = vmatpush1.xpose.msra.mxu0 0.0
        %752 = vmatprep.subr.mxu0 0.0
        %753 = vmatpush1.xpose.msra.mxu0 0.0
        %754 = vmatprep.subr.mxu0 0.0
        %755 = vmatpush1.xpose.msra.mxu0 0.0
        %756 = vmatprep.subr.mxu0 0.0
        %757 = vmatpush1.xpose.msra.mxu0 0.0
        %758 = vmatprep.subr.mxu0 0.0
        %759 = vmatpush1.xpose.msra.mxu0 0.0
        %760 = vmatprep.subr.mxu0 0.0
        %761 = vmatpush1.xpose.msra.mxu0 0.0
        %762 = vmatprep.subr.mxu0 0.0
        %763 = vmatpush1.xpose.msra.mxu0 0.0
        %764 = vmatprep.subr.mxu0 0.0
        %765 = vmatpush1.xpose.msra.mxu0 0.0
        %766 = vmatprep.subr.mxu0 0.0
        %767 = vmatpush1.xpose.msra.mxu0 0.0
        %768 = vmatprep.subr.mxu0 0.0
        %769 = vmatpush1.xpose.msra.mxu0 0.0
        %770 = vmatprep.subr.mxu0 0.0
        %771 = vmatpush1.xpose.msra.mxu0 0.0
        %772 = vmatprep.subr.mxu0 0.0
        %773 = vmatpush1.xpose.msra.mxu0 0.0
        %774 = vmatprep.subr.mxu0 0.0
        %775 = vmatpush1.xpose.msra.mxu0 0.0
        %776 = vmatprep.subr.mxu0 0.0
        %777 = vmatpush1.xpose.msra.mxu0 0.0
        %778 = vmatprep.subr.mxu0 0.0
        %779 = vmatpush1.xpose.msra.mxu0 0.0
        %780 = vmatprep.subr.mxu0 0.0
        %781 = vmatpush1.xpose.msra.mxu0 0.0
        %782 = vmatprep.subr.mxu0 0.0
        %783 = vmatpush1.xpose.msra.mxu0 0.0
        %784 = vmatprep.subr.mxu0 0.0
        %785 = vmatpush1.xpose.msra.mxu0 0.0
        %786 = vmatprep.subr.mxu0 0.0
        %787 = vmatpush1.xpose.msra.mxu0 0.0
        %788 = vmatprep.subr.mxu0 0.0
        %789 = vmatpush1.xpose.msra.mxu0 0.0
        %790 = vmatprep.subr.mxu0 0.0
        %791 = vmatpush1.xpose.msra.mxu0 0.0
        %792 = vmatprep.subr.mxu0 0.0
        %793 = vmatpush1.xpose.msra.mxu0 0.0
        %794 = vmatprep.subr.mxu0 0.0
        %795 = vmatpush1.xpose.msra.mxu0 0.0
        %796 = vmatprep.subr.mxu0 0.0
        %797 = vmatpush1.xpose.msra.mxu0 0.0
        %798 = vmatprep.subr.mxu0 0.0
        %799 = vmatpush1.xpose.msra.mxu0 0.0
        %800 = vmatprep.subr.mxu0 0.0
        %801 = vmatpush1.xpose.msra.mxu0 0.0
        %802 = vmatprep.subr.mxu0 0.0
        %803 = vmatpush1.xpose.msra.mxu0 0.0
        %804 = vmatprep.subr.mxu0 0.0
        %805 = vmatpush1.xpose.msra.mxu0 0.0
        %806 = vmatprep.subr.mxu0 0.0
        %807 = vmatpush1.xpose.msra.mxu0 0.0
        %808 = vmatprep.subr.mxu0 0.0
        %809 = vmatpush1.xpose.msra.mxu0 0.0
        %810 = vmatprep.mubr.f32.mxu0 0.0
        %811 = vmatmul.mubr.f32.gmra.mrb[0].mxu0 %v742
        %v812 = vpop.f32.mrb[0].mxu0
        %v813 = vadd.f32 0.0, %v812
        %v814 = vpop.f32.mrb[0].mxu0
        %815 = vdwg.mxu0
        %816 = vrot.lane.b32.xlu0 %v586, 96
        %v817 = vpop.permute.xlu0 %816
        %v818 = vsel %vm589, %v579, 0
        %v820 = vsel %vm589, %v817, 0
        %822 = vmatprep.subr.mxu0 0.0
        %823 = vmatpush1.xpose.msra.mxu0 %v820
        %824 = vmatprep.subr.mxu0 0.0
        %825 = vmatpush1.xpose.msra.mxu0 0.0
        %826 = vmatprep.subr.mxu0 0.0
        %827 = vmatpush1.xpose.msra.mxu0 0.0
        %828 = vmatprep.subr.mxu0 0.0
        %829 = vmatpush1.xpose.msra.mxu0 0.0
        %830 = vmatprep.subr.mxu0 0.0
        %831 = vmatpush1.xpose.msra.mxu0 0.0
        %832 = vmatprep.subr.mxu0 0.0
        %833 = vmatpush1.xpose.msra.mxu0 0.0
        %834 = vmatprep.subr.mxu0 0.0
        %835 = vmatpush1.xpose.msra.mxu0 0.0
        %836 = vmatprep.subr.mxu0 0.0
        %837 = vmatpush1.xpose.msra.mxu0 0.0
        %838 = vmatprep.subr.mxu0 0.0
        %839 = vmatpush1.xpose.msra.mxu0 0.0
        %840 = vmatprep.subr.mxu0 0.0
        %841 = vmatpush1.xpose.msra.mxu0 0.0
        %842 = vmatprep.subr.mxu0 0.0
        %843 = vmatpush1.xpose.msra.mxu0 0.0
        %844 = vmatprep.subr.mxu0 0.0
        %845 = vmatpush1.xpose.msra.mxu0 0.0
        %846 = vmatprep.subr.mxu0 0.0
        %847 = vmatpush1.xpose.msra.mxu0 0.0
        %848 = vmatprep.subr.mxu0 0.0
        %849 = vmatpush1.xpose.msra.mxu0 0.0
        %850 = vmatprep.subr.mxu0 0.0
        %851 = vmatpush1.xpose.msra.mxu0 0.0
        %852 = vmatprep.subr.mxu0 0.0
        %853 = vmatpush1.xpose.msra.mxu0 0.0
        %854 = vmatprep.subr.mxu0 0.0
        %855 = vmatpush1.xpose.msra.mxu0 0.0
        %856 = vmatprep.subr.mxu0 0.0
        %857 = vmatpush1.xpose.msra.mxu0 0.0
        %858 = vmatprep.subr.mxu0 0.0
        %859 = vmatpush1.xpose.msra.mxu0 0.0
        %860 = vmatprep.subr.mxu0 0.0
        %861 = vmatpush1.xpose.msra.mxu0 0.0
        %862 = vmatprep.subr.mxu0 0.0
        %863 = vmatpush1.xpose.msra.mxu0 0.0
        %864 = vmatprep.subr.mxu0 0.0
        %865 = vmatpush1.xpose.msra.mxu0 0.0
        %866 = vmatprep.subr.mxu0 0.0
        %867 = vmatpush1.xpose.msra.mxu0 0.0
        %868 = vmatprep.subr.mxu0 0.0
        %869 = vmatpush1.xpose.msra.mxu0 0.0
        %870 = vmatprep.subr.mxu0 0.0
        %871 = vmatpush1.xpose.msra.mxu0 0.0
        %872 = vmatprep.subr.mxu0 0.0
        %873 = vmatpush1.xpose.msra.mxu0 0.0
        %874 = vmatprep.subr.mxu0 0.0
        %875 = vmatpush1.xpose.msra.mxu0 0.0
        %876 = vmatprep.subr.mxu0 0.0
        %877 = vmatpush1.xpose.msra.mxu0 0.0
        %878 = vmatprep.subr.mxu0 0.0
        %879 = vmatpush1.xpose.msra.mxu0 0.0
        %880 = vmatprep.subr.mxu0 0.0
        %881 = vmatpush1.xpose.msra.mxu0 0.0
        %882 = vmatprep.subr.mxu0 0.0
        %883 = vmatpush1.xpose.msra.mxu0 0.0
        %884 = vmatprep.subr.mxu0 0.0
        %885 = vmatpush1.xpose.msra.mxu0 0.0
        %886 = vmatprep.mubr.f32.mxu0 0.0
        %887 = vmatmul.mubr.f32.gmra.mrb[0].mxu0 %v818
        %v888 = vpop.f32.mrb[0].mxu0
        %v889 = vadd.f32 0.0, %v888
        %v890 = vpop.f32.mrb[0].mxu0
        %891 = vdwg.mxu0
        %v892 = vsel %vm589, %v661, -inf
        %893 = vmax.xlane.f32.xlu0 %v892
        %v894 = vpop.xlane.xlu0 %893
        %v895 = vsel %vm589, %v737, -inf
        %896 = vmax.xlane.f32.xlu0 %v895
        %v897 = vpop.xlane.xlu0 %896
        %v898 = vsel %vm589, %v813, -inf
        %899 = vmax.xlane.f32.xlu0 %v898
        %v900 = vpop.xlane.xlu0 %899
        %v901 = vsel %vm589, %v889, -inf
        %902 = vmax.xlane.f32.xlu0 %v901
        %v903 = vpop.xlane.xlu0 %902
        %v904 = vsub.f32 %v661, %v894
        %v905 = vsub.f32 %v737, %v897
        %v906 = vsub.f32 %v813, %v900
        %v907 = vsub.f32 %v889, %v903
        %v908 = vmul.f32 %v904, 1.442695
        %v909 = vpow.pop %v908
        %v910 = vmul.f32 %v905, 1.442695
        %v911 = vpow.pop %v910
        %v912 = vmul.f32 %v906, 1.442695
        %v913 = vpow.pop %v912
        %v914 = vmul.f32 %v907, 1.442695
        %v915 = vpow.pop %v914
        %v916 = vsel %vm589, %v909, 0.0
        %917 = vadd.xlane.f32.xlu0 %v916
        %v918 = vpop.xlane.xlu0 %917
        %v919 = vsel %vm589, %v911, 0.0
        %920 = vadd.xlane.f32.xlu0 %v919
        %v921 = vpop.xlane.xlu0 %920
        %v922 = vsel %vm589, %v913, 0.0
        %923 = vadd.xlane.f32.xlu0 %v922
        %v924 = vpop.xlane.xlu0 %923
        %v925 = vsel %vm589, %v915, 0.0
        %926 = vadd.xlane.f32.xlu0 %v925
        %v927 = vpop.xlane.xlu0 %926
        %v928 = vrcp.pop %v918
        %v929 = vrcp.pop %v921
        %v930 = vrcp.pop %v924
        %v931 = vrcp.pop %v927
        %v932 = vmul.f32 %v918, %v928
        %v933 = vmul.f32 %v921, %v929
        %v934 = vmul.f32 %v924, %v930
        %v935 = vmul.f32 %v927, %v931
        %v936 = vsub.f32 2.0, %v932
        %v937 = vsub.f32 2.0, %v933
        %v938 = vsub.f32 2.0, %v934
        %v939 = vsub.f32 2.0, %v935
        %v940 = vmul.f32 %v928, %v936
        %v941 = vmul.f32 %v929, %v937
        %v942 = vmul.f32 %v930, %v938
        %v943 = vmul.f32 %v931, %v939
        %v944 = vmul.f32 %v909, %v940
        %v945 = vmul.f32 %v911, %v941
        %v946 = vmul.f32 %v913, %v942
        %v947 = vmul.f32 %v915, %v943
        %948 = vrot.lane.b32.xlu0 %v569, 64
        %v949 = vpop.permute.xlu0 %948
        %v952 = vsel %vm589, %v944, 0
        %954 = vmatprep.subr.mxu0 0.0
        %955 = vmatpush1.msra.mxu0 %v949
        %956 = vmatprep.subr.mxu0 0.0
        %957 = vmatpush1.msra.mxu0 0.0
        %958 = vmatprep.subr.mxu0 0.0
        %959 = vmatpush1.msra.mxu0 0.0
        %960 = vmatprep.subr.mxu0 0.0
        %961 = vmatpush1.msra.mxu0 0.0
        %962 = vmatprep.subr.mxu0 0.0
        %963 = vmatpush1.msra.mxu0 0.0
        %964 = vmatprep.subr.mxu0 0.0
        %965 = vmatpush1.msra.mxu0 0.0
        %966 = vmatprep.subr.mxu0 0.0
        %967 = vmatpush1.msra.mxu0 0.0
        %968 = vmatprep.subr.mxu0 0.0
        %969 = vmatpush1.msra.mxu0 0.0
        %970 = vmatprep.subr.mxu0 0.0
        %971 = vmatpush1.msra.mxu0 0.0
        %972 = vmatprep.subr.mxu0 0.0
        %973 = vmatpush1.msra.mxu0 0.0
        %974 = vmatprep.subr.mxu0 0.0
        %975 = vmatpush1.msra.mxu0 0.0
        %976 = vmatprep.subr.mxu0 0.0
        %977 = vmatpush1.msra.mxu0 0.0
        %978 = vmatprep.subr.mxu0 0.0
        %979 = vmatpush1.msra.mxu0 0.0
        %980 = vmatprep.subr.mxu0 0.0
        %981 = vmatpush1.msra.mxu0 0.0
        %982 = vmatprep.subr.mxu0 0.0
        %983 = vmatpush1.msra.mxu0 0.0
        %984 = vmatprep.subr.mxu0 0.0
        %985 = vmatpush1.msra.mxu0 0.0
        %986 = vmatprep.subr.mxu0 0.0
        %987 = vmatpush1.msra.mxu0 0.0
        %988 = vmatprep.subr.mxu0 0.0
        %989 = vmatpush1.msra.mxu0 0.0
        %990 = vmatprep.subr.mxu0 0.0
        %991 = vmatpush1.msra.mxu0 0.0
        %992 = vmatprep.subr.mxu0 0.0
        %993 = vmatpush1.msra.mxu0 0.0
        %994 = vmatprep.subr.mxu0 0.0
        %995 = vmatpush1.msra.mxu0 0.0
        %996 = vmatprep.subr.mxu0 0.0
        %997 = vmatpush1.msra.mxu0 0.0
        %998 = vmatprep.subr.mxu0 0.0
        %999 = vmatpush1.msra.mxu0 0.0
        %1000 = vmatprep.subr.mxu0 0.0
        %1001 = vmatpush1.msra.mxu0 0.0
        %1002 = vmatprep.subr.mxu0 0.0
        %1003 = vmatpush1.msra.mxu0 0.0
        %1004 = vmatprep.subr.mxu0 0.0
        %1005 = vmatpush1.msra.mxu0 0.0
        %1006 = vmatprep.subr.mxu0 0.0
        %1007 = vmatpush1.msra.mxu0 0.0
        %1008 = vmatprep.subr.mxu0 0.0
        %1009 = vmatpush1.msra.mxu0 0.0
        %1010 = vmatprep.subr.mxu0 0.0
        %1011 = vmatpush1.msra.mxu0 0.0
        %1012 = vmatprep.subr.mxu0 0.0
        %1013 = vmatpush1.msra.mxu0 0.0
        %1014 = vmatprep.subr.mxu0 0.0
        %1015 = vmatpush1.msra.mxu0 0.0
        %1016 = vmatprep.subr.mxu0 0.0
        %1017 = vmatpush1.msra.mxu0 0.0
        %1018 = vmatprep.mubr.f32.mxu0 0.0
        %1019 = vmatmul.mubr.f32.gmra.mrb[0].mxu0 %v952
        %v1020 = vpop.f32.mrb[0].mxu0
        %v1021 = vadd.f32 0.0, %v1020
        %v1022 = vpop.f32.mrb[0].mxu0
        %1023 = vdwg.mxu0
        %1024 = vrot.lane.b32.xlu0 %v582, 64
        %v1025 = vpop.permute.xlu0 %1024
        %v1028 = vsel %vm589, %v945, 0
        %1030 = vmatprep.subr.mxu0 0.0
        %1031 = vmatpush1.msra.mxu0 %v1025
        %1032 = vmatprep.subr.mxu0 0.0
        %1033 = vmatpush1.msra.mxu0 0.0
        %1034 = vmatprep.subr.mxu0 0.0
        %1035 = vmatpush1.msra.mxu0 0.0
        %1036 = vmatprep.subr.mxu0 0.0
        %1037 = vmatpush1.msra.mxu0 0.0
        %1038 = vmatprep.subr.mxu0 0.0
        %1039 = vmatpush1.msra.mxu0 0.0
        %1040 = vmatprep.subr.mxu0 0.0
        %1041 = vmatpush1.msra.mxu0 0.0
        %1042 = vmatprep.subr.mxu0 0.0
        %1043 = vmatpush1.msra.mxu0 0.0
        %1044 = vmatprep.subr.mxu0 0.0
        %1045 = vmatpush1.msra.mxu0 0.0
        %1046 = vmatprep.subr.mxu0 0.0
        %1047 = vmatpush1.msra.mxu0 0.0
        %1048 = vmatprep.subr.mxu0 0.0
        %1049 = vmatpush1.msra.mxu0 0.0
        %1050 = vmatprep.subr.mxu0 0.0
        %1051 = vmatpush1.msra.mxu0 0.0
        %1052 = vmatprep.subr.mxu0 0.0
        %1053 = vmatpush1.msra.mxu0 0.0
        %1054 = vmatprep.subr.mxu0 0.0
        %1055 = vmatpush1.msra.mxu0 0.0
        %1056 = vmatprep.subr.mxu0 0.0
        %1057 = vmatpush1.msra.mxu0 0.0
        %1058 = vmatprep.subr.mxu0 0.0
        %1059 = vmatpush1.msra.mxu0 0.0
        %1060 = vmatprep.subr.mxu0 0.0
        %1061 = vmatpush1.msra.mxu0 0.0
        %1062 = vmatprep.subr.mxu0 0.0
        %1063 = vmatpush1.msra.mxu0 0.0
        %1064 = vmatprep.subr.mxu0 0.0
        %1065 = vmatpush1.msra.mxu0 0.0
        %1066 = vmatprep.subr.mxu0 0.0
        %1067 = vmatpush1.msra.mxu0 0.0
        %1068 = vmatprep.subr.mxu0 0.0
        %1069 = vmatpush1.msra.mxu0 0.0
        %1070 = vmatprep.subr.mxu0 0.0
        %1071 = vmatpush1.msra.mxu0 0.0
        %1072 = vmatprep.subr.mxu0 0.0
        %1073 = vmatpush1.msra.mxu0 0.0
        %1074 = vmatprep.subr.mxu0 0.0
        %1075 = vmatpush1.msra.mxu0 0.0
        %1076 = vmatprep.subr.mxu0 0.0
        %1077 = vmatpush1.msra.mxu0 0.0
        %1078 = vmatprep.subr.mxu0 0.0
        %1079 = vmatpush1.msra.mxu0 0.0
        %1080 = vmatprep.subr.mxu0 0.0
        %1081 = vmatpush1.msra.mxu0 0.0
        %1082 = vmatprep.subr.mxu0 0.0
        %1083 = vmatpush1.msra.mxu0 0.0
        %1084 = vmatprep.subr.mxu0 0.0
        %1085 = vmatpush1.msra.mxu0 0.0
        %1086 = vmatprep.subr.mxu0 0.0
        %1087 = vmatpush1.msra.mxu0 0.0
        %1088 = vmatprep.subr.mxu0 0.0
        %1089 = vmatpush1.msra.mxu0 0.0
        %1090 = vmatprep.subr.mxu0 0.0
        %1091 = vmatpush1.msra.mxu0 0.0
        %1092 = vmatprep.subr.mxu0 0.0
        %1093 = vmatpush1.msra.mxu0 0.0
        %1094 = vmatprep.mubr.f32.mxu0 0.0
        %1095 = vmatmul.mubr.f32.gmra.mrb[0].mxu0 %v1028
        %v1096 = vpop.f32.mrb[0].mxu0
        %v1097 = vadd.f32 0.0, %v1096
        %v1098 = vpop.f32.mrb[0].mxu0
        %1099 = vdwg.mxu0
        %1100 = vrot.lane.b32.xlu0 %v584, 64
        %v1101 = vpop.permute.xlu0 %1100
        %v1104 = vsel %vm589, %v946, 0
        %1106 = vmatprep.subr.mxu0 0.0
        %1107 = vmatpush1.msra.mxu0 %v1101
        %1108 = vmatprep.subr.mxu0 0.0
        %1109 = vmatpush1.msra.mxu0 0.0
        %1110 = vmatprep.subr.mxu0 0.0
        %1111 = vmatpush1.msra.mxu0 0.0
        %1112 = vmatprep.subr.mxu0 0.0
        %1113 = vmatpush1.msra.mxu0 0.0
        %1114 = vmatprep.subr.mxu0 0.0
        %1115 = vmatpush1.msra.mxu0 0.0
        %1116 = vmatprep.subr.mxu0 0.0
        %1117 = vmatpush1.msra.mxu0 0.0
        %1118 = vmatprep.subr.mxu0 0.0
        %1119 = vmatpush1.msra.mxu0 0.0
        %1120 = vmatprep.subr.mxu0 0.0
        %1121 = vmatpush1.msra.mxu0 0.0
        %1122 = vmatprep.subr.mxu0 0.0
        %1123 = vmatpush1.msra.mxu0 0.0
        %1124 = vmatprep.subr.mxu0 0.0
        %1125 = vmatpush1.msra.mxu0 0.0
        %1126 = vmatprep.subr.mxu0 0.0
        %1127 = vmatpush1.msra.mxu0 0.0
        %1128 = vmatprep.subr.mxu0 0.0
        %1129 = vmatpush1.msra.mxu0 0.0
        %1130 = vmatprep.subr.mxu0 0.0
        %1131 = vmatpush1.msra.mxu0 0.0
        %1132 = vmatprep.subr.mxu0 0.0
        %1133 = vmatpush1.msra.mxu0 0.0
        %1134 = vmatprep.subr.mxu0 0.0
        %1135 = vmatpush1.msra.mxu0 0.0
        %1136 = vmatprep.subr.mxu0 0.0
        %1137 = vmatpush1.msra.mxu0 0.0
        %1138 = vmatprep.subr.mxu0 0.0
        %1139 = vmatpush1.msra.mxu0 0.0
        %1140 = vmatprep.subr.mxu0 0.0
        %1141 = vmatpush1.msra.mxu0 0.0
        %1142 = vmatprep.subr.mxu0 0.0
        %1143 = vmatpush1.msra.mxu0 0.0
        %1144 = vmatprep.subr.mxu0 0.0
        %1145 = vmatpush1.msra.mxu0 0.0
        %1146 = vmatprep.subr.mxu0 0.0
        %1147 = vmatpush1.msra.mxu0 0.0
        %1148 = vmatprep.subr.mxu0 0.0
        %1149 = vmatpush1.msra.mxu0 0.0
        %1150 = vmatprep.subr.mxu0 0.0
        %1151 = vmatpush1.msra.mxu0 0.0
        %1152 = vmatprep.subr.mxu0 0.0
        %1153 = vmatpush1.msra.mxu0 0.0
        %1154 = vmatprep.subr.mxu0 0.0
        %1155 = vmatpush1.msra.mxu0 0.0
        %1156 = vmatprep.subr.mxu0 0.0
        %1157 = vmatpush1.msra.mxu0 0.0
        %1158 = vmatprep.subr.mxu0 0.0
        %1159 = vmatpush1.msra.mxu0 0.0
        %1160 = vmatprep.subr.mxu0 0.0
        %1161 = vmatpush1.msra.mxu0 0.0
        %1162 = vmatprep.subr.mxu0 0.0
        %1163 = vmatpush1.msra.mxu0 0.0
        %1164 = vmatprep.subr.mxu0 0.0
        %1165 = vmatpush1.msra.mxu0 0.0
        %1166 = vmatprep.subr.mxu0 0.0
        %1167 = vmatpush1.msra.mxu0 0.0
        %1168 = vmatprep.subr.mxu0 0.0
        %1169 = vmatpush1.msra.mxu0 0.0
        %1170 = vmatprep.mubr.f32.mxu0 0.0
        %1171 = vmatmul.mubr.f32.gmra.mrb[0].mxu0 %v1104
        %v1172 = vpop.f32.mrb[0].mxu0
        %v1173 = vadd.f32 0.0, %v1172
        %v1174 = vpop.f32.mrb[0].mxu0
        %1175 = vdwg.mxu0
        %1176 = vrot.lane.b32.xlu0 %v586, 64
        %v1177 = vpop.permute.xlu0 %1176
        %v1180 = vsel %vm589, %v947, 0
        %1182 = vmatprep.subr.mxu0 0.0
        %1183 = vmatpush1.msra.mxu0 %v1177
        %1184 = vmatprep.subr.mxu0 0.0
        %1185 = vmatpush1.msra.mxu0 0.0
        %1186 = vmatprep.subr.mxu0 0.0
        %1187 = vmatpush1.msra.mxu0 0.0
        %1188 = vmatprep.subr.mxu0 0.0
        %1189 = vmatpush1.msra.mxu0 0.0
        %1190 = vmatprep.subr.mxu0 0.0
        %1191 = vmatpush1.msra.mxu0 0.0
        %1192 = vmatprep.subr.mxu0 0.0
        %1193 = vmatpush1.msra.mxu0 0.0
        %1194 = vmatprep.subr.mxu0 0.0
        %1195 = vmatpush1.msra.mxu0 0.0
        %1196 = vmatprep.subr.mxu0 0.0
        %1197 = vmatpush1.msra.mxu0 0.0
        %1198 = vmatprep.subr.mxu0 0.0
        %1199 = vmatpush1.msra.mxu0 0.0
        %1200 = vmatprep.subr.mxu0 0.0
        %1201 = vmatpush1.msra.mxu0 0.0
        %1202 = vmatprep.subr.mxu0 0.0
        %1203 = vmatpush1.msra.mxu0 0.0
        %1204 = vmatprep.subr.mxu0 0.0
        %1205 = vmatpush1.msra.mxu0 0.0
        %1206 = vmatprep.subr.mxu0 0.0
        %1207 = vmatpush1.msra.mxu0 0.0
        %1208 = vmatprep.subr.mxu0 0.0
        %1209 = vmatpush1.msra.mxu0 0.0
        %1210 = vmatprep.subr.mxu0 0.0
        %1211 = vmatpush1.msra.mxu0 0.0
        %1212 = vmatprep.subr.mxu0 0.0
        %1213 = vmatpush1.msra.mxu0 0.0
        %1214 = vmatprep.subr.mxu0 0.0
        %1215 = vmatpush1.msra.mxu0 0.0
        %1216 = vmatprep.subr.mxu0 0.0
        %1217 = vmatpush1.msra.mxu0 0.0
        %1218 = vmatprep.subr.mxu0 0.0
        %1219 = vmatpush1.msra.mxu0 0.0
        %1220 = vmatprep.subr.mxu0 0.0
        %1221 = vmatpush1.msra.mxu0 0.0
        %1222 = vmatprep.subr.mxu0 0.0
        %1223 = vmatpush1.msra.mxu0 0.0
        %1224 = vmatprep.subr.mxu0 0.0
        %1225 = vmatpush1.msra.mxu0 0.0
        %1226 = vmatprep.subr.mxu0 0.0
        %1227 = vmatpush1.msra.mxu0 0.0
        %1228 = vmatprep.subr.mxu0 0.0
        %1229 = vmatpush1.msra.mxu0 0.0
        %1230 = vmatprep.subr.mxu0 0.0
        %1231 = vmatpush1.msra.mxu0 0.0
        %1232 = vmatprep.subr.mxu0 0.0
        %1233 = vmatpush1.msra.mxu0 0.0
        %1234 = vmatprep.subr.mxu0 0.0
        %1235 = vmatpush1.msra.mxu0 0.0
        %1236 = vmatprep.subr.mxu0 0.0
        %1237 = vmatpush1.msra.mxu0 0.0
        %1238 = vmatprep.subr.mxu0 0.0
        %1239 = vmatpush1.msra.mxu0 0.0
        %1240 = vmatprep.subr.mxu0 0.0
        %1241 = vmatpush1.msra.mxu0 0.0
        %1242 = vmatprep.subr.mxu0 0.0
        %1243 = vmatpush1.msra.mxu0 0.0
        %1244 = vmatprep.subr.mxu0 0.0
        %1245 = vmatpush1.msra.mxu0 0.0
        %1246 = vmatprep.mubr.f32.mxu0 0.0
        %1247 = vmatmul.mubr.f32.gmra.mrb[0].mxu0 %v1180
        %v1248 = vpop.f32.mrb[0].mxu0
        %v1249 = vadd.f32 0.0, %v1248
        %v1250 = vpop.f32.mrb[0].mxu0
        %1251 = vdwg.mxu0
        %1253 = vrot.lane.b32.xlu0 %v1097, 8
        %v1254 = vpop.permute.xlu0 %1253
        %1257 = vrot.lane.b32.xlu0 %v1173, 16
        %v1258 = vpop.permute.xlu0 %1257
        %1261 = vrot.lane.b32.xlu0 %v1249, 24
        %v1262 = vpop.permute.xlu0 %1261
        %v1264 = vsel %vm589, %v1021, %v1254
        %vm1265 = vcmask 130048
        %v1266 = vsel %vm1265, %v1264, %v1258
        %vm1267 = vcmask 195584
        %v1268 = vsel %vm1267, %v1266, %v1262
        %v1269 = vld [vmem:[%s3] sm:$0xff]
        %v1270 = vld [vmem:[%s3 + $0x8] sm:$0xff]
        %v1271 = vld [vmem:[%s3 + $0x10] sm:$0xff]
        %v1272 = vld [vmem:[%s3 + $0x18] sm:$0xff]
        %v1273 = vld [vmem:[%s4] sm:$0x1]
        %v1275 = vlaneseq
        %v1276 = vshrl.u32 %v1275, 7
        %v1277 = vsub.s32 0, %v1276
        %v1278 = vrot.slane %v1273, %v1277
        %v1281 = vsel %vm459, %v1268, 0
        %1283 = vmatprep.subr.mxu0 0.0
        %1284 = vmatpush1.msra.mxu0 %v1269
        %1285 = vmatprep.subr.mxu0 0.0
        %1286 = vmatpush1.msra.mxu0 %v1270
        %1287 = vmatprep.subr.mxu0 0.0
        %1288 = vmatpush1.msra.mxu0 %v1271
        %1289 = vmatprep.subr.mxu0 0.0
        %1290 = vmatpush1.msra.mxu0 %v1272
        %1291 = vmatprep.subr.mxu0 0.0
        %1292 = vmatpush1.msra.mxu0 0.0
        %1293 = vmatprep.subr.mxu0 0.0
        %1294 = vmatpush1.msra.mxu0 0.0
        %1295 = vmatprep.subr.mxu0 0.0
        %1296 = vmatpush1.msra.mxu0 0.0
        %1297 = vmatprep.subr.mxu0 0.0
        %1298 = vmatpush1.msra.mxu0 0.0
        %1299 = vmatprep.subr.mxu0 0.0
        %1300 = vmatpush1.msra.mxu0 0.0
        %1301 = vmatprep.subr.mxu0 0.0
        %1302 = vmatpush1.msra.mxu0 0.0
        %1303 = vmatprep.subr.mxu0 0.0
        %1304 = vmatpush1.msra.mxu0 0.0
        %1305 = vmatprep.subr.mxu0 0.0
        %1306 = vmatpush1.msra.mxu0 0.0
        %1307 = vmatprep.subr.mxu0 0.0
        %1308 = vmatpush1.msra.mxu0 0.0
        %1309 = vmatprep.subr.mxu0 0.0
        %1310 = vmatpush1.msra.mxu0 0.0
        %1311 = vmatprep.subr.mxu0 0.0
        %1312 = vmatpush1.msra.mxu0 0.0
        %1313 = vmatprep.subr.mxu0 0.0
        %1314 = vmatpush1.msra.mxu0 0.0
        %1315 = vmatprep.subr.mxu0 0.0
        %1316 = vmatpush1.msra.mxu0 0.0
        %1317 = vmatprep.subr.mxu0 0.0
        %1318 = vmatpush1.msra.mxu0 0.0
        %1319 = vmatprep.subr.mxu0 0.0
        %1320 = vmatpush1.msra.mxu0 0.0
        %1321 = vmatprep.subr.mxu0 0.0
        %1322 = vmatpush1.msra.mxu0 0.0
        %1323 = vmatprep.subr.mxu0 0.0
        %1324 = vmatpush1.msra.mxu0 0.0
        %1325 = vmatprep.subr.mxu0 0.0
        %1326 = vmatpush1.msra.mxu0 0.0
        %1327 = vmatprep.subr.mxu0 0.0
        %1328 = vmatpush1.msra.mxu0 0.0
        %1329 = vmatprep.subr.mxu0 0.0
        %1330 = vmatpush1.msra.mxu0 0.0
        %1331 = vmatprep.subr.mxu0 0.0
        %1332 = vmatpush1.msra.mxu0 0.0
        %1333 = vmatprep.subr.mxu0 0.0
        %1334 = vmatpush1.msra.mxu0 0.0
        %1335 = vmatprep.subr.mxu0 0.0
        %1336 = vmatpush1.msra.mxu0 0.0
        %1337 = vmatprep.subr.mxu0 0.0
        %1338 = vmatpush1.msra.mxu0 0.0
        %1339 = vmatprep.subr.mxu0 0.0
        %1340 = vmatpush1.msra.mxu0 0.0
        %1341 = vmatprep.subr.mxu0 0.0
        %1342 = vmatpush1.msra.mxu0 0.0
        %1343 = vmatprep.subr.mxu0 0.0
        %1344 = vmatpush1.msra.mxu0 0.0
        %1345 = vmatprep.subr.mxu0 0.0
        %1346 = vmatpush1.msra.mxu0 0.0
        %1347 = vmatprep.mubr.f32.mxu0 0.0
        %1348 = vmatmul.mubr.f32.gmra.mrb[0].mxu0 %v1281
        %v1349 = vpop.f32.mrb[0].mxu0
        %v1350 = vadd.f32 %v1278, %v1349
        %v1351 = vpop.f32.mrb[0].mxu0
        %1352 = vdwg.mxu0
        %v1353 = vadd.f32 %v456, %v1350
        %v1354 = vld [vmem:[%s11] sm:$0x1]
        %v1355 = vld [vmem:[%s12] sm:$0x1]
        %v1356 = vsel %vm459, %v1353, 0.0
        %1357 = vadd.xlane.f32.xlu0 %v1356
        %v1358 = vpop.xlane.xlu0 %1357
        %v1359 = vmul.f32 %v1358, %v463
        %v1360 = vsub.f32 %v1353, %v1359
        %v1361 = vmul.f32 %v1360, %v1360
        %v1362 = vsel %vm459, %v1361, 0.0
        %1363 = vadd.xlane.f32.xlu0 %v1362
        %v1364 = vpop.xlane.xlu0 %1363
        %v1365 = vmul.f32 %v1364, %v463
        %v1366 = vadd.f32 %v1365, 1e-05
        %v1367 = vrsqrt.pop %v1366
        %v1368 = vmul.f32 %v1360, %v1367
        %v1370 = vlaneseq
        %v1371 = vshrl.u32 %v1370, 7
        %v1372 = vsub.s32 0, %v1371
        %v1373 = vrot.slane %v1354, %v1372
        %v1375 = vmul.f32 %v1368, %v1373
        %v1377 = vlaneseq
        %v1378 = vshrl.u32 %v1377, 7
        %v1379 = vsub.s32 0, %v1378
        %v1380 = vrot.slane %v1355, %v1379
        %v1382 = vadd.f32 %v1375, %v1380
        %v1383 = vld [vmem:[%s5] sm:$0xff]
        %v1384 = vld [vmem:[%s5 + $0x8] sm:$0xff]
        %v1385 = vld [vmem:[%s5 + $0x10] sm:$0xff]
        %v1386 = vld [vmem:[%s5 + $0x18] sm:$0xff]
        %v1387 = vld [vmem:[%s6] sm:$0x1]
        %v1389 = vlaneseq
        %v1390 = vshrl.u32 %v1389, 7
        %v1391 = vsub.s32 0, %v1390
        %v1392 = vrot.slane %v1387, %v1391
        %v1395 = vsel %vm459, %v1382, 0
        %1397 = vmatprep.subr.mxu0 0.0
        %1398 = vmatpush1.msra.mxu0 %v1383
        %1399 = vmatprep.subr.mxu0 0.0
        %1400 = vmatpush1.msra.mxu0 %v1384
        %1401 = vmatprep.subr.mxu0 0.0
        %1402 = vmatpush1.msra.mxu0 %v1385
        %1403 = vmatprep.subr.mxu0 0.0
        %1404 = vmatpush1.msra.mxu0 %v1386
        %1405 = vmatprep.subr.mxu0 0.0
        %1406 = vmatpush1.msra.mxu0 0.0
        %1407 = vmatprep.subr.mxu0 0.0
        %1408 = vmatpush1.msra.mxu0 0.0
        %1409 = vmatprep.subr.mxu0 0.0
        %1410 = vmatpush1.msra.mxu0 0.0
        %1411 = vmatprep.subr.mxu0 0.0
        %1412 = vmatpush1.msra.mxu0 0.0
        %1413 = vmatprep.subr.mxu0 0.0
        %1414 = vmatpush1.msra.mxu0 0.0
        %1415 = vmatprep.subr.mxu0 0.0
        %1416 = vmatpush1.msra.mxu0 0.0
        %1417 = vmatprep.subr.mxu0 0.0
        %1418 = vmatpush1.msra.mxu0 0.0
        %1419 = vmatprep.subr.mxu0 0.0
        %1420 = vmatpush1.msra.mxu0 0.0
        %1421 = vmatprep.subr.mxu0 0.0
        %1422 = vmatpush1.msra.mxu0 0.0
        %1423 = vmatprep.subr.mxu0 0.0
        %1424 = vmatpush1.msra.mxu0 0.0
        %1425 = vmatprep.subr.mxu0 0.0
        %1426 = vmatpush1.msra.mxu0 0.0
        %1427 = vmatprep.subr.mxu0 0.0
        %1428 = vmatpush1.msra.mxu0 0.0
        %1429 = vmatprep.subr.mxu0 0.0
        %1430 = vmatpush1.msra.mxu0 0.0
        %1431 = vmatprep.subr.mxu0 0.0
        %1432 = vmatpush1.msra.mxu0 0.0
        %1433 = vmatprep.subr.mxu0 0.0
        %1434 = vmatpush1.msra.mxu0 0.0
        %1435 = vmatprep.subr.mxu0 0.0
        %1436 = vmatpush1.msra.mxu0 0.0
        %1437 = vmatprep.subr.mxu0 0.0
        %1438 = vmatpush1.msra.mxu0 0.0
        %1439 = vmatprep.subr.mxu0 0.0
        %1440 = vmatpush1.msra.mxu0 0.0
        %1441 = vmatprep.subr.mxu0 0.0
        %1442 = vmatpush1.msra.mxu0 0.0
        %1443 = vmatprep.subr.mxu0 0.0
        %1444 = vmatpush1.msra.mxu0 0.0
        %1445 = vmatprep.subr.mxu0 0.0
        %1446 = vmatpush1.msra.mxu0 0.0
        %1447 = vmatprep.subr.mxu0 0.0
        %1448 = vmatpush1.msra.mxu0 0.0
        %1449 = vmatprep.subr.mxu0 0.0
        %1450 = vmatpush1.msra.mxu0 0.0
        %1451 = vmatprep.subr.mxu0 0.0
        %1452 = vmatpush1.msra.mxu0 0.0
        %1453 = vmatprep.subr.mxu0 0.0
        %1454 = vmatpush1.msra.mxu0 0.0
        %1455 = vmatprep.subr.mxu0 0.0
        %1456 = vmatpush1.msra.mxu0 0.0
        %1457 = vmatprep.subr.mxu0 0.0
        %1458 = vmatpush1.msra.mxu0 0.0
        %1459 = vmatprep.subr.mxu0 0.0
        %1460 = vmatpush1.msra.mxu0 0.0
        %1461 = vmatprep.mubr.f32.mxu0 0.0
        %1462 = vmatmul.mubr.f32.gmra.mrb[0].mxu0 %v1395
        %v1463 = vpop.f32.mrb[0].mxu0
        %v1464 = vadd.f32 %v1392, %v1463
        %v1465 = vpop.f32.mrb[0].mxu0
        %1466 = vdwg.mxu0
        %v1467 = vmax.f32 %v1464, 0.0
        %v1468 = vld [vmem:[%s7] sm:$0xff]
        %v1469 = vld [vmem:[%s7 + $0x8] sm:$0xff]
        %v1470 = vld [vmem:[%s7 + $0x10] sm:$0xff]
        %v1471 = vld [vmem:[%s7 + $0x18] sm:$0xff]
        %v1472 = vld [vmem:[%s7 + $0x20] sm:$0xff]
        %v1473 = vld [vmem:[%s7 + $0x28] sm:$0xff]
        %v1474 = vld [vmem:[%s7 + $0x30] sm:$0xff]
        %v1475 = vld [vmem:[%s7 + $0x38] sm:$0xff]
        %v1476 = vld [vmem:[%s8] sm:$0x1]
        %v1478 = vlaneseq
        %v1479 = vshrl.u32 %v1478, 7
        %v1480 = vsub.s32 0, %v1479
        %v1481 = vrot.slane %v1476, %v1480
        %vm1483 = vcmask 523264
        %v1485 = vsel %vm1483, %v1467, 0
        %1487 = vmatprep.subr.mxu0 0.0
        %1488 = vmatpush1.msra.mxu0 %v1468
        %1489 = vmatprep.subr.mxu0 0.0
        %1490 = vmatpush1.msra.mxu0 %v1469
        %1491 = vmatprep.subr.mxu0 0.0
        %1492 = vmatpush1.msra.mxu0 %v1470
        %1493 = vmatprep.subr.mxu0 0.0
        %1494 = vmatpush1.msra.mxu0 %v1471
        %1495 = vmatprep.subr.mxu0 0.0
        %1496 = vmatpush1.msra.mxu0 %v1472
        %1497 = vmatprep.subr.mxu0 0.0
        %1498 = vmatpush1.msra.mxu0 %v1473
        %1499 = vmatprep.subr.mxu0 0.0
        %1500 = vmatpush1.msra.mxu0 %v1474
        %1501 = vmatprep.subr.mxu0 0.0
        %1502 = vmatpush1.msra.mxu0 %v1475
        %1503 = vmatprep.subr.mxu0 0.0
        %1504 = vmatpush1.msra.mxu0 0.0
        %1505 = vmatprep.subr.mxu0 0.0
        %1506 = vmatpush1.msra.mxu0 0.0
        %1507 = vmatprep.subr.mxu0 0.0
        %1508 = vmatpush1.msra.mxu0 0.0
        %1509 = vmatprep.subr.mxu0 0.0
        %1510 = vmatpush1.msra.mxu0 0.0
        %1511 = vmatprep.subr.mxu0 0.0
        %1512 = vmatpush1.msra.mxu0 0.0
        %1513 = vmatprep.subr.mxu0 0.0
        %1514 = vmatpush1.msra.mxu0 0.0
        %1515 = vmatprep.subr.mxu0 0.0
        %1516 = vmatpush1.msra.mxu0 0.0
        %1517 = vmatprep.subr.mxu0 0.0
        %1518 = vmatpush1.msra.mxu0 0.0
        %1519 = vmatprep.subr.mxu0 0.0
        %1520 = vmatpush1.msra.mxu0 0.0
        %1521 = vmatprep.subr.mxu0 0.0
        %1522 = vmatpush1.msra.mxu0 0.0
        %1523 = vmatprep.subr.mxu0 0.0
        %1524 = vmatpush1.msra.mxu0 0.0
        %1525 = vmatprep.subr.mxu0 0.0
        %1526 = vmatpush1.msra.mxu0 0.0
        %1527 = vmatprep.subr.mxu0 0.0
        %1528 = vmatpush1.msra.mxu0 0.0
        %1529 = vmatprep.subr.mxu0 0.0
        %1530 = vmatpush1.msra.mxu0 0.0
        %1531 = vmatprep.subr.mxu0 0.0
        %1532 = vmatpush1.msra.mxu0 0.0
        %1533 = vmatprep.subr.mxu0 0.0
        %1534 = vmatpush1.msra.mxu0 0.0
        %1535 = vmatprep.subr.mxu0 0.0
        %1536 = vmatpush1.msra.mxu0 0.0
        %1537 = vmatprep.subr.mxu0 0.0
        %1538 = vmatpush1.msra.mxu0 0.0
        %1539 = vmatprep.subr.mxu0 0.0
        %1540 = vmatpush1.msra.mxu0 0.0
        %1541 = vmatprep.subr.mxu0 0.0
        %1542 = vmatpush1.msra.mxu0 0.0
        %1543 = vmatprep.subr.mxu0 0.0
        %1544 = vmatpush1.msra.mxu0 0.0
        %1545 = vmatprep.subr.mxu0 0.0
        %1546 = vmatpush1.msra.mxu0 0.0
        %1547 = vmatprep.subr.mxu0 0.0
        %1548 = vmatpush1.msra.mxu0 0.0
        %1549 = vmatprep.subr.mxu0 0.0
        %1550 = vmatpush1.msra.mxu0 0.0
        %1551 = vmatprep.mubr.f32.mxu0 0.0
        %1552 = vmatmul.mubr.f32.gmra.mrb[0].mxu0 %v1485
        %v1553 = vpop.f32.mrb[0].mxu0
        %v1554 = vadd.f32 %v1481, %v1553
        %v1555 = vpop.f32.mrb[0].mxu0
        %1556 = vdwg.mxu0
        %v1557 = vadd.f32 %v1353, %v1554
        %1558 = vst.msk [vmem:[%s455] sm:$0xff] %vm459, %v1557
        %s1559 = sand.u32 %s316, 1
        %s1560 = scalar_lea.sflag [#allocation4], %s1559
        %s1561 = sand.u32 %s316, 1
        %s1562 = smul.addr %s1561, 8
        %s1563 = scalar_lea.vmem [#allocation5], %s1562
        // Predicated region
        $region77: #{tpu_custom_call.1} parent=71 // pred_check
          %p1564 = pneg %p326
        $region78: #{tpu_custom_call.1} parent=71 // pred_check_branch
          %1566 = sbr.rel (%p1564) target = $region80
        $region79: #{tpu_custom_call.1} parent=71 // pred_region
          %s1568 = ssub.s32 128, 128
          %1569 = vsyncadd %s1560, %s1568
          %s1570 = smul.addr %s30, 128
          %s1571 = scalar_lea.hbm %s13, %s1570
          %s1573 = sshll.u32 %s1563, 4
          %s1574 = int_to_ptr.vmem [resolvable:$true] %s1573
          %1576 = dma.vmem_to_hbm [thread:$0]  %s1574, 128, %s1571, %s1560
        $region80: #{tpu_custom_call.1} parent=71 // pred_fallthru
          _
      $region72: #{tpu_custom_call.1} parent=5 // pred_fallthru
        _
      %p1577 = scmp.le.s32.totalorder 2, %s25
      // Predicated region
      $region81: #{tpu_custom_call.1} parent=5 // pred_check
        %p1578 = pneg %p1577
      $region82: #{tpu_custom_call.1} parent=5 // pred_check_branch
        %1580 = sbr.rel (%p1578) target = $region84
      $region83: #{tpu_custom_call.1} parent=5 // pred_region
        %s1581 = ssub.s32 %s25, 2
        // Predicated region
        $region85: #{tpu_custom_call.1} parent=83 // pred_check
          %p1582 = pneg %p332
        $region86: #{tpu_custom_call.1} parent=83 // pred_check_branch
          %1584 = sbr.rel (%p1582) target = $region88
        $region87: #{tpu_custom_call.1} parent=83 // pred_region
          %s1585 = sand.u32 %s317, 1
          %s1586 = scalar_lea.sflag [#allocation4], %s1585
          %s1587 = sand.u32 %s317, 1
          %s1588 = smul.addr %s1587, 8
          %s1589 = scalar_lea.vmem [#allocation5], %s1588
          %1590 = dma.done %s1586, 128
        $region88: #{tpu_custom_call.1} parent=83 // pred_fallthru
          _
      $region84: #{tpu_custom_call.1} parent=5 // pred_fallthru
        _
    $region6: #{tpu_custom_call.1} parent=1 // loop_footer
      %s29 = sadd.s32 1, %s25
    $region7: #{tpu_custom_call.1} parent=1 // loop_footer_branch
      %24 = sbr.rel target = $region3
    $region8: #{tpu_custom_call.1} parent=1 // loop_exit
      _
    %1591 = vsyncpa [#allocation3], 1
    %s1592 = scalar_lea.sflag [#allocation3], 1
    %1593 = vsyncpa %s1592, 1
    %1594 = vsyncpa [#allocation4], 1
    %s1595 = scalar_lea.sflag [#allocation4], 1
    %1596 = vsyncpa %s1595, 1

</llo_original>
